<compile_context>
chip_gen: v6e
topology: v6e:2x2x1
jax: 0.10.0
libtpu: 0.0.40
codegen_flags: <defaults>
</compile_context>

<pallas_src>
import jax
import jax.numpy as jnp
from jax.experimental import pallas as pl
from jax.experimental.pallas import tpu as pltpu

T_STEPS = 10      # fixed sequence length from the module (x expanded to 10 steps)
LANE = 128        # lane width: D and M padded to multiples of this
SUBLANE = 8       # sublane width: B padded to a multiple of this


def _round_up(n, m):
    return ((n + m - 1) // m) * m


def action_generator_kernel(x_ref, wg_ref, wo_ref, out_ref):
    """10-step LSTM unroll (register-resident h_t) -> one batched projection+softmax."""
    Bp, Dp = x_ref.shape
    x = x_ref[...]                            # (Bp, Dp) f32

    # Unpack the host-packed operands (static, tile-aligned slices, done once).
    wih = wg_ref[pl.ds(0, Dp), :]             # (Dp, 4Dp)  input->gates, transposed
    whh = wg_ref[pl.ds(Dp, Dp), :]            # (Dp, 4Dp)  hidden->gates, transposed
    b = wg_ref[pl.ds(2 * Dp, 1), :]           # (1, 4Dp)   b_ih + b_hh
    wout = wo_ref[pl.ds(0, Dp), :]            # (Dp, Mp)   output projection, transposed
    bout = wo_ref[pl.ds(Dp, 1), :]            # (1, Mp)    output bias (-1e30 in padding)

    # The LSTM input is the same vector at every timestep, so the input-to-gate
    # contribution (and bias) is time-invariant: compute it once on the MXU.
    x_gates = jnp.dot(x, wih, preferred_element_type=jnp.float32) + b   # (Bp, 4Dp)

    h = jnp.zeros((Bp, Dp), jnp.float32)
    c = jnp.zeros((Bp, Dp), jnp.float32)
    hs = []

    # Static unroll: only the recurrent cell stays on the serial chain.  Dp is a
    # lane multiple, so every gate slice is whole lane tiles (no lane extracts).
    for t in range(T_STEPS):
        gates = x_gates + jnp.dot(h, whh, preferred_element_type=jnp.float32)
        i_g = jax.nn.sigmoid(gates[:, 0 * Dp:1 * Dp])
        f_g = jax.nn.sigmoid(gates[:, 1 * Dp:2 * Dp])
        g_g = jnp.tanh(gates[:, 2 * Dp:3 * Dp])
        o_g = jax.nn.sigmoid(gates[:, 3 * Dp:4 * Dp])
        c = f_g * c + i_g * g_g
        h = o_g * jnp.tanh(c)
        hs.append(h)                          # register-resident (Bp, Dp) tile

    # Hoisted epilogue: build the time-major slab from vregs (aligned sublane
    # concat, Bp is a sublane multiple), then ONE projection, ONE bias add,
    # ONE softmax, ONE lane-dense slab store.
    h_all = jnp.concatenate(hs, axis=0)                                 # (T*Bp, Dp)
    logits = jnp.dot(h_all, wout, preferred_element_type=jnp.float32) + bout
    m = jnp.max(logits, axis=-1, keepdims=True)
    e = jnp.exp(logits - m)
    p = e * pl.reciprocal(jnp.sum(e, axis=-1, keepdims=True), approx=False)
    out_ref[...] = p.astype(out_ref.dtype)


def pack_params(weight_ih, weight_hh, bias_ih, bias_hh, weight_out, bias_out):
    """PyTorch LSTM/Linear params -> two lane-padded packed kernel operands.

    Returns:
      w_gates: (2*Dp+1, 4*Dp) = [W_ih^T ; W_hh^T ; b_ih+b_hh], each gate block
               (PyTorch order i, f, g, o) padded from D to Dp columns with zeros.
      w_out:   (Dp+1, Mp) = [W_out^T ; b_out], weight padding = 0,
               bias padding = -1e30 (so padded logits vanish under softmax).
    """
    D = weight_ih.shape[1]
    M = weight_out.shape[0]
    Dp = _round_up(D, LANE)
    Mp = _round_up(M, LANE)

    def gate_mat(w):            # (4D, D), blocks [i; f; g; o] -> (Dp, 4Dp) transposed+padded
        out = jnp.zeros((Dp, 4 * Dp), jnp.float32)
        for k in range(4):
            out = out.at[:D, k * Dp:k * Dp + D].set(w[k * D:(k + 1) * D, :].T)
        return out

    def gate_bias(v):           # (4D,) -> (1, 4Dp), zero padding
        out = jnp.zeros((1, 4 * Dp), jnp.float32)
        for k in range(4):
            out = out.at[0, k * Dp:k * Dp + D].set(v[k * D:(k + 1) * D])
        return out

    w_gates = jnp.concatenate(
        [gate_mat(weight_ih), gate_mat(weight_hh), gate_bias(bias_ih + bias_hh)],
        axis=0)                                                         # (2Dp+1, 4Dp)

    wout_p = jnp.zeros((Dp, Mp), jnp.float32).at[:D, :M].set(weight_out.T)
    bout_p = jnp.full((1, Mp), -1e30, jnp.float32).at[0, :M].set(bias_out)
    w_out = jnp.concatenate([wout_p, bout_p], axis=0)                   # (Dp+1, Mp)
    return w_gates, w_out


def action_generator(x, w_gates, w_out, max_words):
    """x: (B, D) float32.  Packed params from pack_params.  Returns (B, 10, max_words)."""
    B, D = x.shape
    Dp = (w_gates.shape[0] - 1) // 2
    Mp = w_out.shape[1]
    Bp = _round_up(B, SUBLANE)

    # Zero-pad batch to a sublane multiple and state_dim to a lane multiple.
    # Zeros are exactly preserved through the LSTM cell, so real rows/cols are
    # unchanged; padding is sliced away below.
    x_p = jnp.zeros((Bp, Dp), jnp.float32).at[:B, :D].set(x.astype(jnp.float32))

    out_tm = pl.pallas_call(
        action_generator_kernel,
        out_shape=jax.ShapeDtypeStruct((T_STEPS * Bp, Mp), jnp.float32),
        in_specs=[
            pl.BlockSpec(memory_space=pltpu.MemorySpace.VMEM),
            pl.BlockSpec(memory_space=pltpu.MemorySpace.VMEM),
            pl.BlockSpec(memory_space=pltpu.MemorySpace.VMEM),
        ],
        out_specs=pl.BlockSpec(memory_space=pltpu.MemorySpace.VMEM),
    )(x_p, w_gates, w_out)

    # Layout plumbing outside the kernel: time-major padded slab -> (B, T, M).
    out = out_tm.reshape(T_STEPS, Bp, Mp)[:, :B, :max_words]
    return jnp.transpose(out, (1, 0, 2))


def reference(x, weight_ih, weight_hh, bias_ih, bias_hh, weight_out, bias_out):
    """Pure-JAX mirror of PyTorch nn.LSTM(batch_first) + Linear + softmax."""
    B, D = x.shape
    h = jnp.zeros((B, D), jnp.float32)
    c = jnp.zeros((B, D), jnp.float32)
    outs = []
    for _ in range(T_STEPS):
        gates = x @ weight_ih.T + bias_ih + h @ weight_hh.T + bias_hh
        i_g = jax.nn.sigmoid(gates[:, 0 * D:1 * D])
        f_g = jax.nn.sigmoid(gates[:, 1 * D:2 * D])
        g_g = jnp.tanh(gates[:, 2 * D:3 * D])
        o_g = jax.nn.sigmoid(gates[:, 3 * D:4 * D])
        c = f_g * c + i_g * g_g
        h = o_g * jnp.tanh(c)
        logits = h @ weight_out.T + bias_out
        outs.append(jax.nn.softmax(logits, axis=-1))
    return jnp.stack(outs, axis=1)


if __name__ == "__main__":
    # Small shapes consistent with the module's forward.
    B = 2          # batch
    D = 32         # state_dim (LSTM input size == hidden size)
    M = 64         # max_words

    key = jax.random.PRNGKey(0)
    kx, k1, k2, k3, k4, k5, k6 = jax.random.split(key, 7)

    # Deterministic synthetic parameters (PyTorch-style uniform(-1/sqrt(D), 1/sqrt(D))).
    bound = 1.0 / jnp.sqrt(jnp.float32(D))
    weight_ih = jax.random.uniform(k1, (4 * D, D), jnp.float32, -bound, bound)   # (4D, D)
    weight_hh = jax.random.uniform(k2, (4 * D, D), jnp.float32, -bound, bound)   # (4D, D)
    bias_ih = jax.random.uniform(k3, (4 * D,), jnp.float32, -bound, bound)
    bias_hh = jax.random.uniform(k4, (4 * D,), jnp.float32, -bound, bound)
    weight_out = jax.random.uniform(k5, (M, D), jnp.float32, -bound, bound)      # (M, D)
    bias_out = jax.random.uniform(k6, (M,), jnp.float32, -bound, bound)

    x = jax.random.normal(kx, (B, D), jnp.float32)

    # Host-side packing + padding: 3 lane/sublane-aligned kernel operands.
    w_gates, w_out = pack_params(weight_ih, weight_hh, bias_ih, bias_hh,
                                 weight_out, bias_out)

    out = action_generator(x, w_gates, w_out, M)
    out = jax.block_until_ready(out)

    ref = reference(x, weight_ih, weight_hh, bias_ih, bias_hh, weight_out, bias_out)
    assert out.shape == (B, T_STEPS, M)
    assert jnp.allclose(out, ref, atol=1e-5, rtol=1e-5), "mismatch vs reference"
    # Rows of the softmax output should each sum to 1.
    assert jnp.allclose(jnp.sum(out, axis=-1), 1.0, atol=1e-5)

    print("KERNEL_OK")
</pallas_src>

<mosaic_0001>
module attributes {stable_mosaic.version = 11 : i64} {
  func.func @action_generator_kernel(%arg0: memref<8x128xf32, #tpu.memory_space<vmem>>, %arg1: memref<257x512xf32, #tpu.memory_space<vmem>>, %arg2: memref<129x128xf32, #tpu.memory_space<vmem>>, %arg3: memref<80x128xf32, #tpu.memory_space<vmem>>) attributes {dimension_semantics = [], scalar_prefetch = 0 : i64, scratch_operands = 0 : i64, tpu.core_type = #tpu.core_type<tc>} {
    %c0 = arith.constant 0 : index
    %c0_0 = arith.constant 0 : index
    %0 = vector.load %arg0[%c0, %c0_0] : memref<8x128xf32, #tpu.memory_space<vmem>>, vector<8x128xf32>
    %c0_1 = arith.constant 0 : index
    %c0_2 = arith.constant 0 : index
    %1 = vector.load %arg1[%c0_1, %c0_2] : memref<257x512xf32, #tpu.memory_space<vmem>>, vector<128x512xf32>
    %c128 = arith.constant 128 : index
    %c0_3 = arith.constant 0 : index
    %2 = vector.load %arg1[%c128, %c0_3] : memref<257x512xf32, #tpu.memory_space<vmem>>, vector<128x512xf32>
    %c256 = arith.constant 256 : index
    %c0_4 = arith.constant 0 : index
    %3 = vector.load %arg1[%c256, %c0_4] : memref<257x512xf32, #tpu.memory_space<vmem>>, vector<1x512xf32>
    %c0_5 = arith.constant 0 : index
    %c0_6 = arith.constant 0 : index
    %4 = vector.load %arg2[%c0_5, %c0_6] : memref<129x128xf32, #tpu.memory_space<vmem>>, vector<128x128xf32>
    %c128_7 = arith.constant 128 : index
    %c0_8 = arith.constant 0 : index
    %5 = vector.load %arg2[%c128_7, %c0_8] : memref<129x128xf32, #tpu.memory_space<vmem>>, vector<1x128xf32>
    %cst = arith.constant dense<0.000000e+00> : vector<8x512xf32>
    %6 = tpu.matmul %0, %1, %cst {dimension_numbers = #tpu.dot_dimension_numbers<[1], [0], [0], [1], [0, 0, 1, 1], [], []>} : vector<8x128xf32>, vector<128x512xf32>, vector<8x512xf32> -> vector<8x512xf32>
    %7 = vector.broadcast %3 : vector<1x512xf32> to vector<8x512xf32>
    %8 = arith.addf %6, %7 : vector<8x512xf32>
    %cst_9 = arith.constant 0.000000e+00 : f32
    %9 = vector.broadcast %cst_9 : f32 to vector<8x128xf32>
    %cst_10 = arith.constant 0.000000e+00 : f32
    %10 = vector.broadcast %cst_10 : f32 to vector<8x128xf32>
    %cst_11 = arith.constant dense<0.000000e+00> : vector<8x512xf32>
    %11 = tpu.matmul %9, %2, %cst_11 {dimension_numbers = #tpu.dot_dimension_numbers<[1], [0], [0], [1], [0, 0, 1, 1], [], []>} : vector<8x128xf32>, vector<128x512xf32>, vector<8x512xf32> -> vector<8x512xf32>
    %12 = arith.addf %8, %11 : vector<8x512xf32>
    %13 = vector.extract_strided_slice %12 {offsets = [0, 0], sizes = [8, 128], strides = [1, 1]} : vector<8x512xf32> to vector<8x128xf32>
    %14 = arith.negf %13 : vector<8x128xf32>
    %15 = math.exp %14 : vector<8x128xf32>
    %cst_12 = arith.constant 1.000000e+00 : f32
    %16 = vector.broadcast %cst_12 : f32 to vector<8x128xf32>
    %17 = arith.addf %16, %15 : vector<8x128xf32>
    %18 = arith.divf %16, %17 : vector<8x128xf32>
    %19 = vector.extract_strided_slice %12 {offsets = [0, 128], sizes = [8, 128], strides = [1, 1]} : vector<8x512xf32> to vector<8x128xf32>
    %20 = arith.negf %19 : vector<8x128xf32>
    %21 = math.exp %20 : vector<8x128xf32>
    %cst_13 = arith.constant 1.000000e+00 : f32
    %22 = vector.broadcast %cst_13 : f32 to vector<8x128xf32>
    %23 = arith.addf %22, %21 : vector<8x128xf32>
    %24 = arith.divf %22, %23 : vector<8x128xf32>
    %25 = vector.extract_strided_slice %12 {offsets = [0, 256], sizes = [8, 128], strides = [1, 1]} : vector<8x512xf32> to vector<8x128xf32>
    %26 = math.tanh %25 : vector<8x128xf32>
    %27 = vector.extract_strided_slice %12 {offsets = [0, 384], sizes = [8, 128], strides = [1, 1]} : vector<8x512xf32> to vector<8x128xf32>
    %28 = arith.negf %27 : vector<8x128xf32>
    %29 = math.exp %28 : vector<8x128xf32>
    %cst_14 = arith.constant 1.000000e+00 : f32
    %30 = vector.broadcast %cst_14 : f32 to vector<8x128xf32>
    %31 = arith.addf %30, %29 : vector<8x128xf32>
    %32 = arith.divf %30, %31 : vector<8x128xf32>
    %33 = arith.mulf %24, %10 : vector<8x128xf32>
    %34 = arith.mulf %18, %26 : vector<8x128xf32>
    %35 = arith.addf %33, %34 : vector<8x128xf32>
    %36 = math.tanh %35 : vector<8x128xf32>
    %37 = arith.mulf %32, %36 : vector<8x128xf32>
    %cst_15 = arith.constant dense<0.000000e+00> : vector<8x512xf32>
    %38 = tpu.matmul %37, %2, %cst_15 {dimension_numbers = #tpu.dot_dimension_numbers<[1], [0], [0], [1], [0, 0, 1, 1], [], []>} : vector<8x128xf32>, vector<128x512xf32>, vector<8x512xf32> -> vector<8x512xf32>
    %39 = arith.addf %8, %38 : vector<8x512xf32>
    %40 = vector.extract_strided_slice %39 {offsets = [0, 0], sizes = [8, 128], strides = [1, 1]} : vector<8x512xf32> to vector<8x128xf32>
    %41 = arith.negf %40 : vector<8x128xf32>
    %42 = math.exp %41 : vector<8x128xf32>
    %cst_16 = arith.constant 1.000000e+00 : f32
    %43 = vector.broadcast %cst_16 : f32 to vector<8x128xf32>
    %44 = arith.addf %43, %42 : vector<8x128xf32>
    %45 = arith.divf %43, %44 : vector<8x128xf32>
    %46 = vector.extract_strided_slice %39 {offsets = [0, 128], sizes = [8, 128], strides = [1, 1]} : vector<8x512xf32> to vector<8x128xf32>
    %47 = arith.negf %46 : vector<8x128xf32>
    %48 = math.exp %47 : vector<8x128xf32>
    %cst_17 = arith.constant 1.000000e+00 : f32
    %49 = vector.broadcast %cst_17 : f32 to vector<8x128xf32>
    %50 = arith.addf %49, %48 : vector<8x128xf32>
    %51 = arith.divf %49, %50 : vector<8x128xf32>
    %52 = vector.extract_strided_slice %39 {offsets = [0, 256], sizes = [8, 128], strides = [1, 1]} : vector<8x512xf32> to vector<8x128xf32>
    %53 = math.tanh %52 : vector<8x128xf32>
    %54 = vector.extract_strided_slice %39 {offsets = [0, 384], sizes = [8, 128], strides = [1, 1]} : vector<8x512xf32> to vector<8x128xf32>
    %55 = arith.negf %54 : vector<8x128xf32>
    %56 = math.exp %55 : vector<8x128xf32>
    %cst_18 = arith.constant 1.000000e+00 : f32
    %57 = vector.broadcast %cst_18 : f32 to vector<8x128xf32>
    %58 = arith.addf %57, %56 : vector<8x128xf32>
    %59 = arith.divf %57, %58 : vector<8x128xf32>
    %60 = arith.mulf %51, %35 : vector<8x128xf32>
    %61 = arith.mulf %45, %53 : vector<8x128xf32>
    %62 = arith.addf %60, %61 : vector<8x128xf32>
    %63 = math.tanh %62 : vector<8x128xf32>
    %64 = arith.mulf %59, %63 : vector<8x128xf32>
    %cst_19 = arith.constant dense<0.000000e+00> : vector<8x512xf32>
    %65 = tpu.matmul %64, %2, %cst_19 {dimension_numbers = #tpu.dot_dimension_numbers<[1], [0], [0], [1], [0, 0, 1, 1], [], []>} : vector<8x128xf32>, vector<128x512xf32>, vector<8x512xf32> -> vector<8x512xf32>
    %66 = arith.addf %8, %65 : vector<8x512xf32>
    %67 = vector.extract_strided_slice %66 {offsets = [0, 0], sizes = [8, 128], strides = [1, 1]} : vector<8x512xf32> to vector<8x128xf32>
    %68 = arith.negf %67 : vector<8x128xf32>
    %69 = math.exp %68 : vector<8x128xf32>
    %cst_20 = arith.constant 1.000000e+00 : f32
    %70 = vector.broadcast %cst_20 : f32 to vector<8x128xf32>
    %71 = arith.addf %70, %69 : vector<8x128xf32>
    %72 = arith.divf %70, %71 : vector<8x128xf32>
    %73 = vector.extract_strided_slice %66 {offsets = [0, 128], sizes = [8, 128], strides = [1, 1]} : vector<8x512xf32> to vector<8x128xf32>
    %74 = arith.negf %73 : vector<8x128xf32>
    %75 = math.exp %74 : vector<8x128xf32>
    %cst_21 = arith.constant 1.000000e+00 : f32
    %76 = vector.broadcast %cst_21 : f32 to vector<8x128xf32>
    %77 = arith.addf %76, %75 : vector<8x128xf32>
    %78 = arith.divf %76, %77 : vector<8x128xf32>
    %79 = vector.extract_strided_slice %66 {offsets = [0, 256], sizes = [8, 128], strides = [1, 1]} : vector<8x512xf32> to vector<8x128xf32>
    %80 = math.tanh %79 : vector<8x128xf32>
    %81 = vector.extract_strided_slice %66 {offsets = [0, 384], sizes = [8, 128], strides = [1, 1]} : vector<8x512xf32> to vector<8x128xf32>
    %82 = arith.negf %81 : vector<8x128xf32>
    %83 = math.exp %82 : vector<8x128xf32>
    %cst_22 = arith.constant 1.000000e+00 : f32
    %84 = vector.broadcast %cst_22 : f32 to vector<8x128xf32>
    %85 = arith.addf %84, %83 : vector<8x128xf32>
    %86 = arith.divf %84, %85 : vector<8x128xf32>
    %87 = arith.mulf %78, %62 : vector<8x128xf32>
    %88 = arith.mulf %72, %80 : vector<8x128xf32>
    %89 = arith.addf %87, %88 : vector<8x128xf32>
    %90 = math.tanh %89 : vector<8x128xf32>
    %91 = arith.mulf %86, %90 : vector<8x128xf32>
    %cst_23 = arith.constant dense<0.000000e+00> : vector<8x512xf32>
    %92 = tpu.matmul %91, %2, %cst_23 {dimension_numbers = #tpu.dot_dimension_numbers<[1], [0], [0], [1], [0, 0, 1, 1], [], []>} : vector<8x128xf32>, vector<128x512xf32>, vector<8x512xf32> -> vector<8x512xf32>
    %93 = arith.addf %8, %92 : vector<8x512xf32>
    %94 = vector.extract_strided_slice %93 {offsets = [0, 0], sizes = [8, 128], strides = [1, 1]} : vector<8x512xf32> to vector<8x128xf32>
    %95 = arith.negf %94 : vector<8x128xf32>
    %96 = math.exp %95 : vector<8x128xf32>
    %cst_24 = arith.constant 1.000000e+00 : f32
    %97 = vector.broadcast %cst_24 : f32 to vector<8x128xf32>
    %98 = arith.addf %97, %96 : vector<8x128xf32>
    %99 = arith.divf %97, %98 : vector<8x128xf32>
    %100 = vector.extract_strided_slice %93 {offsets = [0, 128], sizes = [8, 128], strides = [1, 1]} : vector<8x512xf32> to vector<8x128xf32>
    %101 = arith.negf %100 : vector<8x128xf32>
    %102 = math.exp %101 : vector<8x128xf32>
    %cst_25 = arith.constant 1.000000e+00 : f32
    %103 = vector.broadcast %cst_25 : f32 to vector<8x128xf32>
    %104 = arith.addf %103, %102 : vector<8x128xf32>
    %105 = arith.divf %103, %104 : vector<8x128xf32>
    %106 = vector.extract_strided_slice %93 {offsets = [0, 256], sizes = [8, 128], strides = [1, 1]} : vector<8x512xf32> to vector<8x128xf32>
    %107 = math.tanh %106 : vector<8x128xf32>
    %108 = vector.extract_strided_slice %93 {offsets = [0, 384], sizes = [8, 128], strides = [1, 1]} : vector<8x512xf32> to vector<8x128xf32>
    %109 = arith.negf %108 : vector<8x128xf32>
    %110 = math.exp %109 : vector<8x128xf32>
    %cst_26 = arith.constant 1.000000e+00 : f32
    %111 = vector.broadcast %cst_26 : f32 to vector<8x128xf32>
    %112 = arith.addf %111, %110 : vector<8x128xf32>
    %113 = arith.divf %111, %112 : vector<8x128xf32>
    %114 = arith.mulf %105, %89 : vector<8x128xf32>
    %115 = arith.mulf %99, %107 : vector<8x128xf32>
    %116 = arith.addf %114, %115 : vector<8x128xf32>
    %117 = math.tanh %116 : vector<8x128xf32>
    %118 = arith.mulf %113, %117 : vector<8x128xf32>
    %cst_27 = arith.constant dense<0.000000e+00> : vector<8x512xf32>
    %119 = tpu.matmul %118, %2, %cst_27 {dimension_numbers = #tpu.dot_dimension_numbers<[1], [0], [0], [1], [0, 0, 1, 1], [], []>} : vector<8x128xf32>, vector<128x512xf32>, vector<8x512xf32> -> vector<8x512xf32>
    %120 = arith.addf %8, %119 : vector<8x512xf32>
    %121 = vector.extract_strided_slice %120 {offsets = [0, 0], sizes = [8, 128], strides = [1, 1]} : vector<8x512xf32> to vector<8x128xf32>
    %122 = arith.negf %121 : vector<8x128xf32>
    %123 = math.exp %122 : vector<8x128xf32>
    %cst_28 = arith.constant 1.000000e+00 : f32
    %124 = vector.broadcast %cst_28 : f32 to vector<8x128xf32>
    %125 = arith.addf %124, %123 : vector<8x128xf32>
    %126 = arith.divf %124, %125 : vector<8x128xf32>
    %127 = vector.extract_strided_slice %120 {offsets = [0, 128], sizes = [8, 128], strides = [1, 1]} : vector<8x512xf32> to vector<8x128xf32>
    %128 = arith.negf %127 : vector<8x128xf32>
    %129 = math.exp %128 : vector<8x128xf32>
    %cst_29 = arith.constant 1.000000e+00 : f32
    %130 = vector.broadcast %cst_29 : f32 to vector<8x128xf32>
    %131 = arith.addf %130, %129 : vector<8x128xf32>
    %132 = arith.divf %130, %131 : vector<8x128xf32>
    %133 = vector.extract_strided_slice %120 {offsets = [0, 256], sizes = [8, 128], strides = [1, 1]} : vector<8x512xf32> to vector<8x128xf32>
    %134 = math.tanh %133 : vector<8x128xf32>
    %135 = vector.extract_strided_slice %120 {offsets = [0, 384], sizes = [8, 128], strides = [1, 1]} : vector<8x512xf32> to vector<8x128xf32>
    %136 = arith.negf %135 : vector<8x128xf32>
    %137 = math.exp %136 : vector<8x128xf32>
    %cst_30 = arith.constant 1.000000e+00 : f32
    %138 = vector.broadcast %cst_30 : f32 to vector<8x128xf32>
    %139 = arith.addf %138, %137 : vector<8x128xf32>
    %140 = arith.divf %138, %139 : vector<8x128xf32>
    %141 = arith.mulf %132, %116 : vector<8x128xf32>
    %142 = arith.mulf %126, %134 : vector<8x128xf32>
    %143 = arith.addf %141, %142 : vector<8x128xf32>
    %144 = math.tanh %143 : vector<8x128xf32>
    %145 = arith.mulf %140, %144 : vector<8x128xf32>
    %cst_31 = arith.constant dense<0.000000e+00> : vector<8x512xf32>
    %146 = tpu.matmul %145, %2, %cst_31 {dimension_numbers = #tpu.dot_dimension_numbers<[1], [0], [0], [1], [0, 0, 1, 1], [], []>} : vector<8x128xf32>, vector<128x512xf32>, vector<8x512xf32> -> vector<8x512xf32>
    %147 = arith.addf %8, %146 : vector<8x512xf32>
    %148 = vector.extract_strided_slice %147 {offsets = [0, 0], sizes = [8, 128], strides = [1, 1]} : vector<8x512xf32> to vector<8x128xf32>
    %149 = arith.negf %148 : vector<8x128xf32>
    %150 = math.exp %149 : vector<8x128xf32>
    %cst_32 = arith.constant 1.000000e+00 : f32
    %151 = vector.broadcast %cst_32 : f32 to vector<8x128xf32>
    %152 = arith.addf %151, %150 : vector<8x128xf32>
    %153 = arith.divf %151, %152 : vector<8x128xf32>
    %154 = vector.extract_strided_slice %147 {offsets = [0, 128], sizes = [8, 128], strides = [1, 1]} : vector<8x512xf32> to vector<8x128xf32>
    %155 = arith.negf %154 : vector<8x128xf32>
    %156 = math.exp %155 : vector<8x128xf32>
    %cst_33 = arith.constant 1.000000e+00 : f32
    %157 = vector.broadcast %cst_33 : f32 to vector<8x128xf32>
    %158 = arith.addf %157, %156 : vector<8x128xf32>
    %159 = arith.divf %157, %158 : vector<8x128xf32>
    %160 = vector.extract_strided_slice %147 {offsets = [0, 256], sizes = [8, 128], strides = [1, 1]} : vector<8x512xf32> to vector<8x128xf32>
    %161 = math.tanh %160 : vector<8x128xf32>
    %162 = vector.extract_strided_slice %147 {offsets = [0, 384], sizes = [8, 128], strides = [1, 1]} : vector<8x512xf32> to vector<8x128xf32>
    %163 = arith.negf %162 : vector<8x128xf32>
    %164 = math.exp %163 : vector<8x128xf32>
    %cst_34 = arith.constant 1.000000e+00 : f32
    %165 = vector.broadcast %cst_34 : f32 to vector<8x128xf32>
    %166 = arith.addf %165, %164 : vector<8x128xf32>
    %167 = arith.divf %165, %166 : vector<8x128xf32>
    %168 = arith.mulf %159, %143 : vector<8x128xf32>
    %169 = arith.mulf %153, %161 : vector<8x128xf32>
    %170 = arith.addf %168, %169 : vector<8x128xf32>
    %171 = math.tanh %170 : vector<8x128xf32>
    %172 = arith.mulf %167, %171 : vector<8x128xf32>
    %cst_35 = arith.constant dense<0.000000e+00> : vector<8x512xf32>
    %173 = tpu.matmul %172, %2, %cst_35 {dimension_numbers = #tpu.dot_dimension_numbers<[1], [0], [0], [1], [0, 0, 1, 1], [], []>} : vector<8x128xf32>, vector<128x512xf32>, vector<8x512xf32> -> vector<8x512xf32>
    %174 = arith.addf %8, %173 : vector<8x512xf32>
    %175 = vector.extract_strided_slice %174 {offsets = [0, 0], sizes = [8, 128], strides = [1, 1]} : vector<8x512xf32> to vector<8x128xf32>
    %176 = arith.negf %175 : vector<8x128xf32>
    %177 = math.exp %176 : vector<8x128xf32>
    %cst_36 = arith.constant 1.000000e+00 : f32
    %178 = vector.broadcast %cst_36 : f32 to vector<8x128xf32>
    %179 = arith.addf %178, %177 : vector<8x128xf32>
    %180 = arith.divf %178, %179 : vector<8x128xf32>
    %181 = vector.extract_strided_slice %174 {offsets = [0, 128], sizes = [8, 128], strides = [1, 1]} : vector<8x512xf32> to vector<8x128xf32>
    %182 = arith.negf %181 : vector<8x128xf32>
    %183 = math.exp %182 : vector<8x128xf32>
    %cst_37 = arith.constant 1.000000e+00 : f32
    %184 = vector.broadcast %cst_37 : f32 to vector<8x128xf32>
    %185 = arith.addf %184, %183 : vector<8x128xf32>
    %186 = arith.divf %184, %185 : vector<8x128xf32>
    %187 = vector.extract_strided_slice %174 {offsets = [0, 256], sizes = [8, 128], strides = [1, 1]} : vector<8x512xf32> to vector<8x128xf32>
    %188 = math.tanh %187 : vector<8x128xf32>
    %189 = vector.extract_strided_slice %174 {offsets = [0, 384], sizes = [8, 128], strides = [1, 1]} : vector<8x512xf32> to vector<8x128xf32>
    %190 = arith.negf %189 : vector<8x128xf32>
    %191 = math.exp %190 : vector<8x128xf32>
    %cst_38 = arith.constant 1.000000e+00 : f32
    %192 = vector.broadcast %cst_38 : f32 to vector<8x128xf32>
    %193 = arith.addf %192, %191 : vector<8x128xf32>
    %194 = arith.divf %192, %193 : vector<8x128xf32>
    %195 = arith.mulf %186, %170 : vector<8x128xf32>
    %196 = arith.mulf %180, %188 : vector<8x128xf32>
    %197 = arith.addf %195, %196 : vector<8x128xf32>
    %198 = math.tanh %197 : vector<8x128xf32>
    %199 = arith.mulf %194, %198 : vector<8x128xf32>
    %cst_39 = arith.constant dense<0.000000e+00> : vector<8x512xf32>
    %200 = tpu.matmul %199, %2, %cst_39 {dimension_numbers = #tpu.dot_dimension_numbers<[1], [0], [0], [1], [0, 0, 1, 1], [], []>} : vector<8x128xf32>, vector<128x512xf32>, vector<8x512xf32> -> vector<8x512xf32>
    %201 = arith.addf %8, %200 : vector<8x512xf32>
    %202 = vector.extract_strided_slice %201 {offsets = [0, 0], sizes = [8, 128], strides = [1, 1]} : vector<8x512xf32> to vector<8x128xf32>
    %203 = arith.negf %202 : vector<8x128xf32>
    %204 = math.exp %203 : vector<8x128xf32>
    %cst_40 = arith.constant 1.000000e+00 : f32
    %205 = vector.broadcast %cst_40 : f32 to vector<8x128xf32>
    %206 = arith.addf %205, %204 : vector<8x128xf32>
    %207 = arith.divf %205, %206 : vector<8x128xf32>
    %208 = vector.extract_strided_slice %201 {offsets = [0, 128], sizes = [8, 128], strides = [1, 1]} : vector<8x512xf32> to vector<8x128xf32>
    %209 = arith.negf %208 : vector<8x128xf32>
    %210 = math.exp %209 : vector<8x128xf32>
    %cst_41 = arith.constant 1.000000e+00 : f32
    %211 = vector.broadcast %cst_41 : f32 to vector<8x128xf32>
    %212 = arith.addf %211, %210 : vector<8x128xf32>
    %213 = arith.divf %211, %212 : vector<8x128xf32>
    %214 = vector.extract_strided_slice %201 {offsets = [0, 256], sizes = [8, 128], strides = [1, 1]} : vector<8x512xf32> to vector<8x128xf32>
    %215 = math.tanh %214 : vector<8x128xf32>
    %216 = vector.extract_strided_slice %201 {offsets = [0, 384], sizes = [8, 128], strides = [1, 1]} : vector<8x512xf32> to vector<8x128xf32>
    %217 = arith.negf %216 : vector<8x128xf32>
    %218 = math.exp %217 : vector<8x128xf32>
    %cst_42 = arith.constant 1.000000e+00 : f32
    %219 = vector.broadcast %cst_42 : f32 to vector<8x128xf32>
    %220 = arith.addf %219, %218 : vector<8x128xf32>
    %221 = arith.divf %219, %220 : vector<8x128xf32>
    %222 = arith.mulf %213, %197 : vector<8x128xf32>
    %223 = arith.mulf %207, %215 : vector<8x128xf32>
    %224 = arith.addf %222, %223 : vector<8x128xf32>
    %225 = math.tanh %224 : vector<8x128xf32>
    %226 = arith.mulf %221, %225 : vector<8x128xf32>
    %cst_43 = arith.constant dense<0.000000e+00> : vector<8x512xf32>
    %227 = tpu.matmul %226, %2, %cst_43 {dimension_numbers = #tpu.dot_dimension_numbers<[1], [0], [0], [1], [0, 0, 1, 1], [], []>} : vector<8x128xf32>, vector<128x512xf32>, vector<8x512xf32> -> vector<8x512xf32>
    %228 = arith.addf %8, %227 : vector<8x512xf32>
    %229 = vector.extract_strided_slice %228 {offsets = [0, 0], sizes = [8, 128], strides = [1, 1]} : vector<8x512xf32> to vector<8x128xf32>
    %230 = arith.negf %229 : vector<8x128xf32>
    %231 = math.exp %230 : vector<8x128xf32>
    %cst_44 = arith.constant 1.000000e+00 : f32
    %232 = vector.broadcast %cst_44 : f32 to vector<8x128xf32>
    %233 = arith.addf %232, %231 : vector<8x128xf32>
    %234 = arith.divf %232, %233 : vector<8x128xf32>
    %235 = vector.extract_strided_slice %228 {offsets = [0, 128], sizes = [8, 128], strides = [1, 1]} : vector<8x512xf32> to vector<8x128xf32>
    %236 = arith.negf %235 : vector<8x128xf32>
    %237 = math.exp %236 : vector<8x128xf32>
    %cst_45 = arith.constant 1.000000e+00 : f32
    %238 = vector.broadcast %cst_45 : f32 to vector<8x128xf32>
    %239 = arith.addf %238, %237 : vector<8x128xf32>
    %240 = arith.divf %238, %239 : vector<8x128xf32>
    %241 = vector.extract_strided_slice %228 {offsets = [0, 256], sizes = [8, 128], strides = [1, 1]} : vector<8x512xf32> to vector<8x128xf32>
    %242 = math.tanh %241 : vector<8x128xf32>
    %243 = vector.extract_strided_slice %228 {offsets = [0, 384], sizes = [8, 128], strides = [1, 1]} : vector<8x512xf32> to vector<8x128xf32>
    %244 = arith.negf %243 : vector<8x128xf32>
    %245 = math.exp %244 : vector<8x128xf32>
    %cst_46 = arith.constant 1.000000e+00 : f32
    %246 = vector.broadcast %cst_46 : f32 to vector<8x128xf32>
    %247 = arith.addf %246, %245 : vector<8x128xf32>
    %248 = arith.divf %246, %247 : vector<8x128xf32>
    %249 = arith.mulf %240, %224 : vector<8x128xf32>
    %250 = arith.mulf %234, %242 : vector<8x128xf32>
    %251 = arith.addf %249, %250 : vector<8x128xf32>
    %252 = math.tanh %251 : vector<8x128xf32>
    %253 = arith.mulf %248, %252 : vector<8x128xf32>
    %cst_47 = arith.constant dense<0.000000e+00> : vector<8x512xf32>
    %254 = tpu.matmul %253, %2, %cst_47 {dimension_numbers = #tpu.dot_dimension_numbers<[1], [0], [0], [1], [0, 0, 1, 1], [], []>} : vector<8x128xf32>, vector<128x512xf32>, vector<8x512xf32> -> vector<8x512xf32>
    %255 = arith.addf %8, %254 : vector<8x512xf32>
    %256 = vector.extract_strided_slice %255 {offsets = [0, 0], sizes = [8, 128], strides = [1, 1]} : vector<8x512xf32> to vector<8x128xf32>
    %257 = arith.negf %256 : vector<8x128xf32>
    %258 = math.exp %257 : vector<8x128xf32>
    %cst_48 = arith.constant 1.000000e+00 : f32
    %259 = vector.broadcast %cst_48 : f32 to vector<8x128xf32>
    %260 = arith.addf %259, %258 : vector<8x128xf32>
    %261 = arith.divf %259, %260 : vector<8x128xf32>
    %262 = vector.extract_strided_slice %255 {offsets = [0, 128], sizes = [8, 128], strides = [1, 1]} : vector<8x512xf32> to vector<8x128xf32>
    %263 = arith.negf %262 : vector<8x128xf32>
    %264 = math.exp %263 : vector<8x128xf32>
    %cst_49 = arith.constant 1.000000e+00 : f32
    %265 = vector.broadcast %cst_49 : f32 to vector<8x128xf32>
    %266 = arith.addf %265, %264 : vector<8x128xf32>
    %267 = arith.divf %265, %266 : vector<8x128xf32>
    %268 = vector.extract_strided_slice %255 {offsets = [0, 256], sizes = [8, 128], strides = [1, 1]} : vector<8x512xf32> to vector<8x128xf32>
    %269 = math.tanh %268 : vector<8x128xf32>
    %270 = vector.extract_strided_slice %255 {offsets = [0, 384], sizes = [8, 128], strides = [1, 1]} : vector<8x512xf32> to vector<8x128xf32>
    %271 = arith.negf %270 : vector<8x128xf32>
    %272 = math.exp %271 : vector<8x128xf32>
    %cst_50 = arith.constant 1.000000e+00 : f32
    %273 = vector.broadcast %cst_50 : f32 to vector<8x128xf32>
    %274 = arith.addf %273, %272 : vector<8x128xf32>
    %275 = arith.divf %273, %274 : vector<8x128xf32>
    %276 = arith.mulf %267, %251 : vector<8x128xf32>
    %277 = arith.mulf %261, %269 : vector<8x128xf32>
    %278 = arith.addf %276, %277 : vector<8x128xf32>
    %279 = math.tanh %278 : vector<8x128xf32>
    %280 = arith.mulf %275, %279 : vector<8x128xf32>
    %281 = tpu.concatenate %37, %64, %91, %118, %145, %172, %199, %226, %253, %280 in 0 : vector<8x128xf32>, vector<8x128xf32>, vector<8x128xf32>, vector<8x128xf32>, vector<8x128xf32>, vector<8x128xf32>, vector<8x128xf32>, vector<8x128xf32>, vector<8x128xf32>, vector<8x128xf32> -> vector<80x128xf32>
    %cst_51 = arith.constant dense<0.000000e+00> : vector<80x128xf32>
    %282 = tpu.matmul %281, %4, %cst_51 {dimension_numbers = #tpu.dot_dimension_numbers<[1], [0], [0], [1], [0, 0, 1, 1], [], []>} : vector<80x128xf32>, vector<128x128xf32>, vector<80x128xf32> -> vector<80x128xf32>
    %283 = vector.broadcast %5 : vector<1x128xf32> to vector<80x128xf32>
    %284 = arith.addf %282, %283 : vector<80x128xf32>
    %cst_52 = arith.constant dense<0xFF800000> : vector<80xf32>
    %285 = vector.multi_reduction <maximumf>, %284, %cst_52 [1] : vector<80x128xf32> to vector<80xf32>
    %286 = vector.shape_cast %285 : vector<80xf32> to vector<80x1xf32>
    %287 = vector.broadcast %286 : vector<80x1xf32> to vector<80x128xf32>
    %288 = arith.subf %284, %287 : vector<80x128xf32>
    %289 = math.exp %288 : vector<80x128xf32>
    %cst_53 = arith.constant dense<0.000000e+00> : vector<80xf32>
    %290 = vector.multi_reduction <add>, %289, %cst_53 [1] : vector<80x128xf32> to vector<80xf32>
    %291 = vector.shape_cast %290 : vector<80xf32> to vector<80x1xf32>
    %292 = tpu.reciprocal %291 : vector<80x1xf32> -> vector<80x1xf32>
    %293 = vector.broadcast %292 : vector<80x1xf32> to vector<80x128xf32>
    %294 = arith.mulf %289, %293 : vector<80x128xf32>
    %c0_54 = arith.constant 0 : index
    %c0_55 = arith.constant 0 : index
    %295 = vector.load %arg3[%c0_54, %c0_55] : memref<80x128xf32, #tpu.memory_space<vmem>>, vector<80x128xf32>
    tpu.vector_store %arg3[%c0_54, %c0_55], %294 {strides = array<i32>} : memref<80x128xf32, #tpu.memory_space<vmem>>, vector<80x128xf32>,
    return
  }
}

</mosaic_0001>

<llo_original>
// kernel: tpu_custom_call.1
$region0: #{tpu_custom_call.1}
  #allocation0 [shape = 'u32[]', space=smem, size = 0x4, offset = 0x4, fixed_abs, tag = 'smem constant byte address 0x4 - core index']
  #allocation1 [shape = 'u32[144,128]{1,0:T(1,128)}', space=vmem, size = 0x12000, scoped, tag = 'internal scratch']
  %s0 = inlined_call_operand.hbm [shape: f32[8,128], index: 0, kind: input, shape index: {}]
  %s1 = inlined_call_operand.hbm [shape: f32[257,512], index: 1, kind: input, shape index: {}]
  %s2 = inlined_call_operand.hbm [shape: f32[129,128], index: 2, kind: input, shape index: {}]
  %s3 = inlined_call_operand.hbm [shape: f32[80,128], index: 3, kind: output, shape index: {}]
  %s4 = sld [smem:[#allocation0]]
  $region34: #{tpu_custom_call.1} parent=0
    _
  %s6 = ssub.s32 1, %s4
  %s7 = scalar_select 0, %s6, %s4
  $region1: #{tpu_custom_call.1} parent=0
    #allocation2 [shape = 'u8[4096]{0}', space=vmem, size = 0x1000, scoped, tag = 'input window, operand 0, single buffered']
    #allocation3 [shape = 's32[1]{0}', space=sflag, size = 0x4, scoped, tag = 'scoped memory for tpu_custom_call.1']
    #allocation4 [shape = 's32[1]{0}', space=sflag, size = 0x4, scoped, tag = 'scoped memory for tpu_custom_call.1']
    #allocation5 [shape = 'u8[540672]{0}', space=vmem, size = 0x84000, scoped, tag = 'input window, operand 1, single buffered']
    #allocation6 [shape = 's32[1]{0}', space=sflag, size = 0x4, scoped, tag = 'scoped memory for tpu_custom_call.1']
    #allocation7 [shape = 'u8[69632]{0}', space=vmem, size = 0x11000, scoped, tag = 'input window, operand 2, single buffered']
    #allocation8 [shape = 'u8[40960]{0}', space=vmem, size = 0xa000, scoped, tag = 'output window, operand 0, single buffered']
    %8 = vsyncpa [#allocation3], 0
    %9 = vsyncpa [#allocation6], 0
    %10 = vsyncpa [#allocation4], 0
    // Predicated region
    $region2: #{tpu_custom_call.1} parent=1 // pred_check
      _
    $region3: #{tpu_custom_call.1} parent=1 // pred_check_branch
      %12 = sbr.rel (0) target = $region5
    $region4: #{tpu_custom_call.1} parent=1 // pred_region
      %s14 = ssub.s32 128, 128
      %15 = vsyncadd [#allocation3], %s14
      %s17 = sshll.u32 [#allocation2], 4
      %s18 = int_to_ptr.vmem [resolvable:$true] %s17
      %20 = dma.hbm_to_vmem [thread:$0]  %s0, 128, %s18, [#allocation3]
    $region5: #{tpu_custom_call.1} parent=1 // pred_fallthru
      _
    // Predicated region
    $region6: #{tpu_custom_call.1} parent=1 // pred_check
      _
    $region7: #{tpu_custom_call.1} parent=1 // pred_check_branch
      %22 = sbr.rel (0) target = $region9
    $region8: #{tpu_custom_call.1} parent=1 // pred_region
      %s24 = ssub.s32 16896, 16896
      %25 = vsyncadd [#allocation6], %s24
      %s26 = sshll.u32 [#allocation5], 4
      %s27 = int_to_ptr.vmem [resolvable:$true] %s26
      %32 = dma.hbm_to_vmem [thread:$0]  %s1, 16896, %s27, [#allocation6], 512, 512, 32
    $region9: #{tpu_custom_call.1} parent=1 // pred_fallthru
      _
    // Predicated region
    $region10: #{tpu_custom_call.1} parent=1 // pred_check
      _
    $region11: #{tpu_custom_call.1} parent=1 // pred_check_branch
      %34 = sbr.rel (0) target = $region13
    $region12: #{tpu_custom_call.1} parent=1 // pred_region
      %s36 = ssub.s32 2176, 2176
      %37 = vsyncadd [#allocation6], %s36
      %s38 = sshll.u32 [#allocation7], 4
      %s39 = int_to_ptr.vmem [resolvable:$true] %s38
      %44 = dma.hbm_to_vmem [thread:$0]  %s2, 2176, %s39, [#allocation6], 128, 128, 8
    $region13: #{tpu_custom_call.1} parent=1 // pred_fallthru
      _
    // Predicated region
    $region14: #{tpu_custom_call.1} parent=1 // pred_check
      _
    $region15: #{tpu_custom_call.1} parent=1 // pred_check_branch
      %46 = sbr.rel (0) target = $region17
    $region16: #{tpu_custom_call.1} parent=1 // pred_region
      %47 = dma.done [#allocation3], 128
    $region17: #{tpu_custom_call.1} parent=1 // pred_fallthru
      _
    // Predicated region
    $region18: #{tpu_custom_call.1} parent=1 // pred_check
      _
    $region19: #{tpu_custom_call.1} parent=1 // pred_check_branch
      %49 = sbr.rel (0) target = $region21
    $region20: #{tpu_custom_call.1} parent=1 // pred_region
      %50 = dma.done [#allocation6], 16896
    $region21: #{tpu_custom_call.1} parent=1 // pred_fallthru
      _
    // Predicated region
    $region22: #{tpu_custom_call.1} parent=1 // pred_check
      _
    $region23: #{tpu_custom_call.1} parent=1 // pred_check_branch
      %52 = sbr.rel (0) target = $region25
    $region24: #{tpu_custom_call.1} parent=1 // pred_region
      %53 = dma.done [#allocation6], 2176
    $region25: #{tpu_custom_call.1} parent=1 // pred_fallthru
      _
    %v54 = vld [vmem:[#allocation2] sm:$0xff]
    %v55 = vld [vmem:[#allocation5] sm:$0xff]
    %v56 = vld [vmem:[#allocation5 + $0x8] sm:$0xff]
    %v57 = vld [vmem:[#allocation5 + $0x10] sm:$0xff]
    %v58 = vld [vmem:[#allocation5 + $0x18] sm:$0xff]
    %v59 = vld [vmem:[#allocation5 + $0x20] sm:$0xff]
    %v60 = vld [vmem:[#allocation5 + $0x28] sm:$0xff]
    %v61 = vld [vmem:[#allocation5 + $0x30] sm:$0xff]
    %v62 = vld [vmem:[#allocation5 + $0x38] sm:$0xff]
    %v63 = vld [vmem:[#allocation5 + $0x40] sm:$0xff]
    %v64 = vld [vmem:[#allocation5 + $0x48] sm:$0xff]
    %v65 = vld [vmem:[#allocation5 + $0x50] sm:$0xff]
    %v66 = vld [vmem:[#allocation5 + $0x58] sm:$0xff]
    %v67 = vld [vmem:[#allocation5 + $0x60] sm:$0xff]
    %v68 = vld [vmem:[#allocation5 + $0x68] sm:$0xff]
    %v69 = vld [vmem:[#allocation5 + $0x70] sm:$0xff]
    %v70 = vld [vmem:[#allocation5 + $0x78] sm:$0xff]
    %v71 = vld [vmem:[#allocation5 + $0x80] sm:$0xff]
    %v72 = vld [vmem:[#allocation5 + $0x88] sm:$0xff]
    %v73 = vld [vmem:[#allocation5 + $0x90] sm:$0xff]
    %v74 = vld [vmem:[#allocation5 + $0x98] sm:$0xff]
    %v75 = vld [vmem:[#allocation5 + $0xa0] sm:$0xff]
    %v76 = vld [vmem:[#allocation5 + $0xa8] sm:$0xff]
    %v77 = vld [vmem:[#allocation5 + $0xb0] sm:$0xff]
    %v78 = vld [vmem:[#allocation5 + $0xb8] sm:$0xff]
    %v79 = vld [vmem:[#allocation5 + $0xc0] sm:$0xff]
    %v80 = vld [vmem:[#allocation5 + $0xc8] sm:$0xff]
    %v81 = vld [vmem:[#allocation5 + $0xd0] sm:$0xff]
    %v82 = vld [vmem:[#allocation5 + $0xd8] sm:$0xff]
    %v83 = vld [vmem:[#allocation5 + $0xe0] sm:$0xff]
    %v84 = vld [vmem:[#allocation5 + $0xe8] sm:$0xff]
    %v85 = vld [vmem:[#allocation5 + $0xf0] sm:$0xff]
    %v86 = vld [vmem:[#allocation5 + $0xf8] sm:$0xff]
    %v87 = vld [vmem:[#allocation5 + $0x100] sm:$0xff]
    %v88 = vld [vmem:[#allocation5 + $0x108] sm:$0xff]
    %v89 = vld [vmem:[#allocation5 + $0x110] sm:$0xff]
    %v90 = vld [vmem:[#allocation5 + $0x118] sm:$0xff]
    %v91 = vld [vmem:[#allocation5 + $0x120] sm:$0xff]
    %v92 = vld [vmem:[#allocation5 + $0x128] sm:$0xff]
    %v93 = vld [vmem:[#allocation5 + $0x130] sm:$0xff]
    %v94 = vld [vmem:[#allocation5 + $0x138] sm:$0xff]
    %v95 = vld [vmem:[#allocation5 + $0x140] sm:$0xff]
    %v96 = vld [vmem:[#allocation5 + $0x148] sm:$0xff]
    %v97 = vld [vmem:[#allocation5 + $0x150] sm:$0xff]
    %v98 = vld [vmem:[#allocation5 + $0x158] sm:$0xff]
    %v99 = vld [vmem:[#allocation5 + $0x160] sm:$0xff]
    %v100 = vld [vmem:[#allocation5 + $0x168] sm:$0xff]
    %v101 = vld [vmem:[#allocation5 + $0x170] sm:$0xff]
    %v102 = vld [vmem:[#allocation5 + $0x178] sm:$0xff]
    %v103 = vld [vmem:[#allocation5 + $0x180] sm:$0xff]
    %v104 = vld [vmem:[#allocation5 + $0x188] sm:$0xff]
    %v105 = vld [vmem:[#allocation5 + $0x190] sm:$0xff]
    %v106 = vld [vmem:[#allocation5 + $0x198] sm:$0xff]
    %v107 = vld [vmem:[#allocation5 + $0x1a0] sm:$0xff]
    %v108 = vld [vmem:[#allocation5 + $0x1a8] sm:$0xff]
    %v109 = vld [vmem:[#allocation5 + $0x1b0] sm:$0xff]
    %v110 = vld [vmem:[#allocation5 + $0x1b8] sm:$0xff]
    %v111 = vld [vmem:[#allocation5 + $0x1c0] sm:$0xff]
    %v112 = vld [vmem:[#allocation5 + $0x1c8] sm:$0xff]
    %v113 = vld [vmem:[#allocation5 + $0x1d0] sm:$0xff]
    %v114 = vld [vmem:[#allocation5 + $0x1d8] sm:$0xff]
    %v115 = vld [vmem:[#allocation5 + $0x1e0] sm:$0xff]
    %v116 = vld [vmem:[#allocation5 + $0x1e8] sm:$0xff]
    %v117 = vld [vmem:[#allocation5 + $0x1f0] sm:$0xff]
    %v118 = vld [vmem:[#allocation5 + $0x1f8] sm:$0xff]
    %v119 = vld [vmem:[#allocation5 + $0x200] sm:$0xff]
    %v120 = vld [vmem:[#allocation5 + $0x208] sm:$0xff]
    %v121 = vld [vmem:[#allocation5 + $0x210] sm:$0xff]
    %v122 = vld [vmem:[#allocation5 + $0x218] sm:$0xff]
    %v123 = vld [vmem:[#allocation5 + $0x220] sm:$0xff]
    %v124 = vld [vmem:[#allocation5 + $0x228] sm:$0xff]
    %v125 = vld [vmem:[#allocation5 + $0x230] sm:$0xff]
    %v126 = vld [vmem:[#allocation5 + $0x238] sm:$0xff]
    %v127 = vld [vmem:[#allocation5 + $0x240] sm:$0xff]
    %v128 = vld [vmem:[#allocation5 + $0x248] sm:$0xff]
    %v129 = vld [vmem:[#allocation5 + $0x250] sm:$0xff]
    %v130 = vld [vmem:[#allocation5 + $0x258] sm:$0xff]
    %v131 = vld [vmem:[#allocation5 + $0x260] sm:$0xff]
    %v132 = vld [vmem:[#allocation5 + $0x268] sm:$0xff]
    %v133 = vld [vmem:[#allocation5 + $0x270] sm:$0xff]
    %v134 = vld [vmem:[#allocation5 + $0x278] sm:$0xff]
    %v135 = vld [vmem:[#allocation5 + $0x280] sm:$0xff]
    %v136 = vld [vmem:[#allocation5 + $0x288] sm:$0xff]
    %v137 = vld [vmem:[#allocation5 + $0x290] sm:$0xff]
    %v138 = vld [vmem:[#allocation5 + $0x298] sm:$0xff]
    %v139 = vld [vmem:[#allocation5 + $0x2a0] sm:$0xff]
    %v140 = vld [vmem:[#allocation5 + $0x2a8] sm:$0xff]
    %v141 = vld [vmem:[#allocation5 + $0x2b0] sm:$0xff]
    %v142 = vld [vmem:[#allocation5 + $0x2b8] sm:$0xff]
    %v143 = vld [vmem:[#allocation5 + $0x2c0] sm:$0xff]
    %v144 = vld [vmem:[#allocation5 + $0x2c8] sm:$0xff]
    %v145 = vld [vmem:[#allocation5 + $0x2d0] sm:$0xff]
    %v146 = vld [vmem:[#allocation5 + $0x2d8] sm:$0xff]
    %v147 = vld [vmem:[#allocation5 + $0x2e0] sm:$0xff]
    %v148 = vld [vmem:[#allocation5 + $0x2e8] sm:$0xff]
    %v149 = vld [vmem:[#allocation5 + $0x2f0] sm:$0xff]
    %v150 = vld [vmem:[#allocation5 + $0x2f8] sm:$0xff]
    %v151 = vld [vmem:[#allocation5 + $0x300] sm:$0xff]
    %v152 = vld [vmem:[#allocation5 + $0x308] sm:$0xff]
    %v153 = vld [vmem:[#allocation5 + $0x310] sm:$0xff]
    %v154 = vld [vmem:[#allocation5 + $0x318] sm:$0xff]
    %v155 = vld [vmem:[#allocation5 + $0x320] sm:$0xff]
    %v156 = vld [vmem:[#allocation5 + $0x328] sm:$0xff]
    %v157 = vld [vmem:[#allocation5 + $0x330] sm:$0xff]
    %v158 = vld [vmem:[#allocation5 + $0x338] sm:$0xff]
    %v159 = vld [vmem:[#allocation5 + $0x340] sm:$0xff]
    %v160 = vld [vmem:[#allocation5 + $0x348] sm:$0xff]
    %v161 = vld [vmem:[#allocation5 + $0x350] sm:$0xff]
    %v162 = vld [vmem:[#allocation5 + $0x358] sm:$0xff]
    %v163 = vld [vmem:[#allocation5 + $0x360] sm:$0xff]
    %v164 = vld [vmem:[#allocation5 + $0x368] sm:$0xff]
    %v165 = vld [vmem:[#allocation5 + $0x370] sm:$0xff]
    %v166 = vld [vmem:[#allocation5 + $0x378] sm:$0xff]
    %v167 = vld [vmem:[#allocation5 + $0x380] sm:$0xff]
    %v168 = vld [vmem:[#allocation5 + $0x388] sm:$0xff]
    %v169 = vld [vmem:[#allocation5 + $0x390] sm:$0xff]
    %v170 = vld [vmem:[#allocation5 + $0x398] sm:$0xff]
    %v171 = vld [vmem:[#allocation5 + $0x3a0] sm:$0xff]
    %v172 = vld [vmem:[#allocation5 + $0x3a8] sm:$0xff]
    %v173 = vld [vmem:[#allocation5 + $0x3b0] sm:$0xff]
    %v174 = vld [vmem:[#allocation5 + $0x3b8] sm:$0xff]
    %v175 = vld [vmem:[#allocation5 + $0x3c0] sm:$0xff]
    %v176 = vld [vmem:[#allocation5 + $0x3c8] sm:$0xff]
    %v177 = vld [vmem:[#allocation5 + $0x3d0] sm:$0xff]
    %v178 = vld [vmem:[#allocation5 + $0x3d8] sm:$0xff]
    %v179 = vld [vmem:[#allocation5 + $0x3e0] sm:$0xff]
    %v180 = vld [vmem:[#allocation5 + $0x3e8] sm:$0xff]
    %v181 = vld [vmem:[#allocation5 + $0x3f0] sm:$0xff]
    %v182 = vld [vmem:[#allocation5 + $0x3f8] sm:$0xff]
    %s183 = scalar_lea.vmem [#allocation5], 1024
    %v184 = vld [vmem:[%s183] ss:$8 sm:$0xf]
    %v185 = vld [vmem:[#allocation7] sm:$0xff]
    %v186 = vld [vmem:[#allocation7 + $0x8] sm:$0xff]
    %v187 = vld [vmem:[#allocation7 + $0x10] sm:$0xff]
    %v188 = vld [vmem:[#allocation7 + $0x18] sm:$0xff]
    %v189 = vld [vmem:[#allocation7 + $0x20] sm:$0xff]
    %v190 = vld [vmem:[#allocation7 + $0x28] sm:$0xff]
    %v191 = vld [vmem:[#allocation7 + $0x30] sm:$0xff]
    %v192 = vld [vmem:[#allocation7 + $0x38] sm:$0xff]
    %v193 = vld [vmem:[#allocation7 + $0x40] sm:$0xff]
    %v194 = vld [vmem:[#allocation7 + $0x48] sm:$0xff]
    %v195 = vld [vmem:[#allocation7 + $0x50] sm:$0xff]
    %v196 = vld [vmem:[#allocation7 + $0x58] sm:$0xff]
    %v197 = vld [vmem:[#allocation7 + $0x60] sm:$0xff]
    %v198 = vld [vmem:[#allocation7 + $0x68] sm:$0xff]
    %v199 = vld [vmem:[#allocation7 + $0x70] sm:$0xff]
    %v200 = vld [vmem:[#allocation7 + $0x78] sm:$0xff]
    %v201 = vld [vmem:[#allocation7 + $0x80] sm:$0x1]
    %v203 = vlaneseq
    %v204 = vshrl.u32 %v203, 7
    %v205 = vsub.s32 0, %v204
    %v206 = vrot.slane %v184, %v205
    %v207 = vlaneseq
    %v208 = vshrl.u32 %v207, 7
    %v209 = vsub.s32 1, %v208
    %v210 = vrot.slane %v184, %v209
    %v211 = vlaneseq
    %v212 = vshrl.u32 %v211, 7
    %v213 = vsub.s32 2, %v212
    %v214 = vrot.slane %v184, %v213
    %v215 = vlaneseq
    %v216 = vshrl.u32 %v215, 7
    %v217 = vsub.s32 3, %v216
    %v218 = vrot.slane %v184, %v217
    %223 = vmatprep.subr.mxu0 %v116
    %224 = vmatpush1.msra.mxu0 %v115
    %225 = vmatprep.subr.mxu0 %v112
    %226 = vmatpush1.msra.mxu0 %v111
    %227 = vmatprep.subr.mxu0 %v108
    %228 = vmatpush1.msra.mxu0 %v107
    %229 = vmatprep.subr.mxu0 %v104
    %230 = vmatpush1.msra.mxu0 %v103
    %231 = vmatprep.subr.mxu0 %v100
    %232 = vmatpush1.msra.mxu0 %v99
    %233 = vmatprep.subr.mxu0 %v96
    %234 = vmatpush1.msra.mxu0 %v95
    %235 = vmatprep.subr.mxu0 %v92
    %236 = vmatpush1.msra.mxu0 %v91
    %237 = vmatprep.subr.mxu0 %v88
    %238 = vmatpush1.msra.mxu0 %v87
    %239 = vmatprep.subr.mxu0 %v84
    %240 = vmatpush1.msra.mxu0 %v83
    %241 = vmatprep.subr.mxu0 %v80
    %242 = vmatpush1.msra.mxu0 %v79
    %243 = vmatprep.subr.mxu0 %v76
    %244 = vmatpush1.msra.mxu0 %v75
    %245 = vmatprep.subr.mxu0 %v72
    %246 = vmatpush1.msra.mxu0 %v71
    %247 = vmatprep.subr.mxu0 %v68
    %248 = vmatpush1.msra.mxu0 %v67
    %249 = vmatprep.subr.mxu0 %v64
    %250 = vmatpush1.msra.mxu0 %v63
    %251 = vmatprep.subr.mxu0 %v60
    %252 = vmatpush1.msra.mxu0 %v59
    %253 = vmatprep.subr.mxu0 %v56
    %254 = vmatpush1.msra.mxu0 %v55
    %255 = vmatprep.subr.mxu0 0.0
    %256 = vmatpush2.msra.mxu0 0.0
    %257 = vmatprep.subr.mxu0 0.0
    %258 = vmatpush2.msra.mxu0 0.0
    %259 = vmatprep.subr.mxu0 0.0
    %260 = vmatpush2.msra.mxu0 0.0
    %261 = vmatprep.subr.mxu0 0.0
    %262 = vmatpush2.msra.mxu0 0.0
    %263 = vmatprep.subr.mxu0 0.0
    %264 = vmatpush2.msra.mxu0 0.0
    %265 = vmatprep.subr.mxu0 0.0
    %266 = vmatpush2.msra.mxu0 0.0
    %267 = vmatprep.subr.mxu0 0.0
    %268 = vmatpush2.msra.mxu0 0.0
    %269 = vmatprep.subr.mxu0 0.0
    %270 = vmatpush2.msra.mxu0 0.0
    %271 = vmatprep.subr.mxu0 0.0
    %272 = vmatpush2.msra.mxu0 0.0
    %273 = vmatprep.subr.mxu0 0.0
    %274 = vmatpush2.msra.mxu0 0.0
    %275 = vmatprep.subr.mxu0 0.0
    %276 = vmatpush2.msra.mxu0 0.0
    %277 = vmatprep.subr.mxu0 0.0
    %278 = vmatpush2.msra.mxu0 0.0
    %279 = vmatprep.subr.mxu0 0.0
    %280 = vmatpush2.msra.mxu0 0.0
    %281 = vmatprep.subr.mxu0 0.0
    %282 = vmatpush2.msra.mxu0 0.0
    %283 = vmatprep.subr.mxu0 0.0
    %284 = vmatpush2.msra.mxu0 0.0
    %285 = vmatprep.subr.mxu0 0.0
    %286 = vmatpush2.msra.mxu0 0.0
    %287 = vmatprep.mubr.f32.mxu0 0.0
    %288 = vmatmul.mubr.f32.gmra.mxu0 %v54
    %v289 = vpop.f32.mrf.mxu0
    %v290 = vadd.f32 %v206, %v289
    %v291 = vpop.f32.mrf.mxu0
    %v292 = vadd.f32 %v210, %v291
    %293 = vdwg.mxu0
    %294 = vmatprep.subr.mxu0 %v118
    %295 = vmatpush1.msra.mxu0 %v117
    %296 = vmatprep.subr.mxu0 %v114
    %297 = vmatpush1.msra.mxu0 %v113
    %298 = vmatprep.subr.mxu0 %v110
    %299 = vmatpush1.msra.mxu0 %v109
    %300 = vmatprep.subr.mxu0 %v106
    %301 = vmatpush1.msra.mxu0 %v105
    %302 = vmatprep.subr.mxu0 %v102
    %303 = vmatpush1.msra.mxu0 %v101
    %304 = vmatprep.subr.mxu0 %v98
    %305 = vmatpush1.msra.mxu0 %v97
    %306 = vmatprep.subr.mxu0 %v94
    %307 = vmatpush1.msra.mxu0 %v93
    %308 = vmatprep.subr.mxu0 %v90
    %309 = vmatpush1.msra.mxu0 %v89
    %310 = vmatprep.subr.mxu0 %v86
    %311 = vmatpush1.msra.mxu0 %v85
    %312 = vmatprep.subr.mxu0 %v82
    %313 = vmatpush1.msra.mxu0 %v81
    %314 = vmatprep.subr.mxu0 %v78
    %315 = vmatpush1.msra.mxu0 %v77
    %316 = vmatprep.subr.mxu0 %v74
    %317 = vmatpush1.msra.mxu0 %v73
    %318 = vmatprep.subr.mxu0 %v70
    %319 = vmatpush1.msra.mxu0 %v69
    %320 = vmatprep.subr.mxu0 %v66
    %321 = vmatpush1.msra.mxu0 %v65
    %322 = vmatprep.subr.mxu0 %v62
    %323 = vmatpush1.msra.mxu0 %v61
    %324 = vmatprep.subr.mxu0 %v58
    %325 = vmatpush1.msra.mxu0 %v57
    %326 = vmatprep.subr.mxu0 0.0
    %327 = vmatpush2.msra.mxu0 0.0
    %328 = vmatprep.subr.mxu0 0.0
    %329 = vmatpush2.msra.mxu0 0.0
    %330 = vmatprep.subr.mxu0 0.0
    %331 = vmatpush2.msra.mxu0 0.0
    %332 = vmatprep.subr.mxu0 0.0
    %333 = vmatpush2.msra.mxu0 0.0
    %334 = vmatprep.subr.mxu0 0.0
    %335 = vmatpush2.msra.mxu0 0.0
    %336 = vmatprep.subr.mxu0 0.0
    %337 = vmatpush2.msra.mxu0 0.0
    %338 = vmatprep.subr.mxu0 0.0
    %339 = vmatpush2.msra.mxu0 0.0
    %340 = vmatprep.subr.mxu0 0.0
    %341 = vmatpush2.msra.mxu0 0.0
    %342 = vmatprep.subr.mxu0 0.0
    %343 = vmatpush2.msra.mxu0 0.0
    %344 = vmatprep.subr.mxu0 0.0
    %345 = vmatpush2.msra.mxu0 0.0
    %346 = vmatprep.subr.mxu0 0.0
    %347 = vmatpush2.msra.mxu0 0.0
    %348 = vmatprep.subr.mxu0 0.0
    %349 = vmatpush2.msra.mxu0 0.0
    %350 = vmatprep.subr.mxu0 0.0
    %351 = vmatpush2.msra.mxu0 0.0
    %352 = vmatprep.subr.mxu0 0.0
    %353 = vmatpush2.msra.mxu0 0.0
    %354 = vmatprep.subr.mxu0 0.0
    %355 = vmatpush2.msra.mxu0 0.0
    %356 = vmatprep.subr.mxu0 0.0
    %357 = vmatpush2.msra.mxu0 0.0
    %358 = vmatprep.mubr.f32.mxu0 0.0
    %359 = vmatmul.mubr.f32.gmra.mxu0 %v54
    %v360 = vpop.f32.mrf.mxu0
    %v361 = vadd.f32 %v214, %v360
    %v362 = vpop.f32.mrf.mxu0
    %v363 = vadd.f32 %v218, %v362
    %364 = vdwg.mxu0
    %365 = vmatprep.subr.mxu0 %v180
    %366 = vmatpush1.msra.mxu0 %v179
    %367 = vmatprep.subr.mxu0 %v176
    %368 = vmatpush1.msra.mxu0 %v175
    %369 = vmatprep.subr.mxu0 %v172
    %370 = vmatpush1.msra.mxu0 %v171
    %371 = vmatprep.subr.mxu0 %v168
    %372 = vmatpush1.msra.mxu0 %v167
    %373 = vmatprep.subr.mxu0 %v164
    %374 = vmatpush1.msra.mxu0 %v163
    %375 = vmatprep.subr.mxu0 %v160
    %376 = vmatpush1.msra.mxu0 %v159
    %377 = vmatprep.subr.mxu0 %v156
    %378 = vmatpush1.msra.mxu0 %v155
    %379 = vmatprep.subr.mxu0 %v152
    %380 = vmatpush1.msra.mxu0 %v151
    %381 = vmatprep.subr.mxu0 %v148
    %382 = vmatpush1.msra.mxu0 %v147
    %383 = vmatprep.subr.mxu0 %v144
    %384 = vmatpush1.msra.mxu0 %v143
    %385 = vmatprep.subr.mxu0 %v140
    %386 = vmatpush1.msra.mxu0 %v139
    %387 = vmatprep.subr.mxu0 %v136
    %388 = vmatpush1.msra.mxu0 %v135
    %389 = vmatprep.subr.mxu0 %v132
    %390 = vmatpush1.msra.mxu0 %v131
    %391 = vmatprep.subr.mxu0 %v128
    %392 = vmatpush1.msra.mxu0 %v127
    %393 = vmatprep.subr.mxu0 %v124
    %394 = vmatpush1.msra.mxu0 %v123
    %395 = vmatprep.subr.mxu0 %v120
    %396 = vmatpush1.msra.mxu0 %v119
    %397 = vmatprep.subr.mxu0 0.0
    %398 = vmatpush2.msra.mxu0 0.0
    %399 = vmatprep.subr.mxu0 0.0
    %400 = vmatpush2.msra.mxu0 0.0
    %401 = vmatprep.subr.mxu0 0.0
    %402 = vmatpush2.msra.mxu0 0.0
    %403 = vmatprep.subr.mxu0 0.0
    %404 = vmatpush2.msra.mxu0 0.0
    %405 = vmatprep.subr.mxu0 0.0
    %406 = vmatpush2.msra.mxu0 0.0
    %407 = vmatprep.subr.mxu0 0.0
    %408 = vmatpush2.msra.mxu0 0.0
    %409 = vmatprep.subr.mxu0 0.0
    %410 = vmatpush2.msra.mxu0 0.0
    %411 = vmatprep.subr.mxu0 0.0
    %412 = vmatpush2.msra.mxu0 0.0
    %413 = vmatprep.subr.mxu0 0.0
    %414 = vmatpush2.msra.mxu0 0.0
    %415 = vmatprep.subr.mxu0 0.0
    %416 = vmatpush2.msra.mxu0 0.0
    %417 = vmatprep.subr.mxu0 0.0
    %418 = vmatpush2.msra.mxu0 0.0
    %419 = vmatprep.subr.mxu0 0.0
    %420 = vmatpush2.msra.mxu0 0.0
    %421 = vmatprep.subr.mxu0 0.0
    %422 = vmatpush2.msra.mxu0 0.0
    %423 = vmatprep.subr.mxu0 0.0
    %424 = vmatpush2.msra.mxu0 0.0
    %425 = vmatprep.subr.mxu0 0.0
    %426 = vmatpush2.msra.mxu0 0.0
    %427 = vmatprep.subr.mxu0 0.0
    %428 = vmatpush2.msra.mxu0 0.0
    %429 = vmatprep.mubr.f32.mxu0 0.0
    %430 = vmatmul.mubr.f32.gmra.mxu0 0.0
    %v431 = vpop.f32.mrf.mxu0
    %v432 = vadd.f32 0.0, %v431
    %v433 = vpop.f32.mrf.mxu0
    %v434 = vadd.f32 0.0, %v433
    %435 = vdwg.mxu0
    %436 = vmatprep.subr.mxu0 %v182
    %437 = vmatpush1.msra.mxu0 %v181
    %438 = vmatprep.subr.mxu0 %v178
    %439 = vmatpush1.msra.mxu0 %v177
    %440 = vmatprep.subr.mxu0 %v174
    %441 = vmatpush1.msra.mxu0 %v173
    %442 = vmatprep.subr.mxu0 %v170
    %443 = vmatpush1.msra.mxu0 %v169
    %444 = vmatprep.subr.mxu0 %v166
    %445 = vmatpush1.msra.mxu0 %v165
    %446 = vmatprep.subr.mxu0 %v162
    %447 = vmatpush1.msra.mxu0 %v161
    %448 = vmatprep.subr.mxu0 %v158
    %449 = vmatpush1.msra.mxu0 %v157
    %450 = vmatprep.subr.mxu0 %v154
    %451 = vmatpush1.msra.mxu0 %v153
    %452 = vmatprep.subr.mxu0 %v150
    %453 = vmatpush1.msra.mxu0 %v149
    %454 = vmatprep.subr.mxu0 %v146
    %455 = vmatpush1.msra.mxu0 %v145
    %456 = vmatprep.subr.mxu0 %v142
    %457 = vmatpush1.msra.mxu0 %v141
    %458 = vmatprep.subr.mxu0 %v138
    %459 = vmatpush1.msra.mxu0 %v137
    %460 = vmatprep.subr.mxu0 %v134
    %461 = vmatpush1.msra.mxu0 %v133
    %462 = vmatprep.subr.mxu0 %v130
    %463 = vmatpush1.msra.mxu0 %v129
    %464 = vmatprep.subr.mxu0 %v126
    %465 = vmatpush1.msra.mxu0 %v125
    %466 = vmatprep.subr.mxu0 %v122
    %467 = vmatpush1.msra.mxu0 %v121
    %468 = vmatprep.subr.mxu0 0.0
    %469 = vmatpush2.msra.mxu0 0.0
    %470 = vmatprep.subr.mxu0 0.0
    %471 = vmatpush2.msra.mxu0 0.0
    %472 = vmatprep.subr.mxu0 0.0
    %473 = vmatpush2.msra.mxu0 0.0
    %474 = vmatprep.subr.mxu0 0.0
    %475 = vmatpush2.msra.mxu0 0.0
    %476 = vmatprep.subr.mxu0 0.0
    %477 = vmatpush2.msra.mxu0 0.0
    %478 = vmatprep.subr.mxu0 0.0
    %479 = vmatpush2.msra.mxu0 0.0
    %480 = vmatprep.subr.mxu0 0.0
    %481 = vmatpush2.msra.mxu0 0.0
    %482 = vmatprep.subr.mxu0 0.0
    %483 = vmatpush2.msra.mxu0 0.0
    %484 = vmatprep.subr.mxu0 0.0
    %485 = vmatpush2.msra.mxu0 0.0
    %486 = vmatprep.subr.mxu0 0.0
    %487 = vmatpush2.msra.mxu0 0.0
    %488 = vmatprep.subr.mxu0 0.0
    %489 = vmatpush2.msra.mxu0 0.0
    %490 = vmatprep.subr.mxu0 0.0
    %491 = vmatpush2.msra.mxu0 0.0
    %492 = vmatprep.subr.mxu0 0.0
    %493 = vmatpush2.msra.mxu0 0.0
    %494 = vmatprep.subr.mxu0 0.0
    %495 = vmatpush2.msra.mxu0 0.0
    %496 = vmatprep.subr.mxu0 0.0
    %497 = vmatpush2.msra.mxu0 0.0
    %498 = vmatprep.subr.mxu0 0.0
    %499 = vmatpush2.msra.mxu0 0.0
    %500 = vmatprep.mubr.f32.mxu0 0.0
    %501 = vmatmul.mubr.f32.gmra.mxu0 0.0
    %v502 = vpop.f32.mrf.mxu0
    %v503 = vadd.f32 0.0, %v502
    %v504 = vpop.f32.mrf.mxu0
    %v505 = vadd.f32 0.0, %v504
    %506 = vdwg.mxu0
    %v507 = vadd.f32 %v290, %v432
    %v508 = vadd.f32 %v292, %v434
    %v509 = vadd.f32 %v361, %v503
    %v510 = vadd.f32 %v363, %v505
    %v511 = vxor.u32 %v507, 2147483648
    %v512 = vmul.f32 %v511, 1.442695
    %v513 = vpow.pop %v512
    %v514 = vadd.f32 %v513, 1.0
    %v515 = vrcp.pop %v514
    %v516 = vmul.f32 1.0, %v515
    %v517 = vxor.u32 %v508, 2147483648
    %v518 = vmul.f32 %v517, 1.442695
    %v519 = vpow.pop %v518
    %v520 = vadd.f32 %v519, 1.0
    %v521 = vrcp.pop %v520
    %v522 = vmul.f32 1.0, %v521
    %v523 = vtanh.pop %v509
    %v524 = vxor.u32 %v510, 2147483648
    %v525 = vmul.f32 %v524, 1.442695
    %v526 = vpow.pop %v525
    %v527 = vadd.f32 %v526, 1.0
    %v528 = vrcp.pop %v527
    %v529 = vmul.f32 1.0, %v528
    %v530 = vmul.f32 %v522, 0.0
    %v531 = vmul.f32 %v516, %v523
    %v532 = vadd.f32 %v530, %v531
    %v533 = vtanh.pop %v532
    %v534 = vmul.f32 %v529, %v533
    %535 = vmatprep.subr.mxu0 %v180
    %536 = vmatpush1.msra.mxu0 %v179
    %537 = vmatprep.subr.mxu0 %v176
    %538 = vmatpush1.msra.mxu0 %v175
    %539 = vmatprep.subr.mxu0 %v172
    %540 = vmatpush1.msra.mxu0 %v171
    %541 = vmatprep.subr.mxu0 %v168
    %542 = vmatpush1.msra.mxu0 %v167
    %543 = vmatprep.subr.mxu0 %v164
    %544 = vmatpush1.msra.mxu0 %v163
    %545 = vmatprep.subr.mxu0 %v160
    %546 = vmatpush1.msra.mxu0 %v159
    %547 = vmatprep.subr.mxu0 %v156
    %548 = vmatpush1.msra.mxu0 %v155
    %549 = vmatprep.subr.mxu0 %v152
    %550 = vmatpush1.msra.mxu0 %v151
    %551 = vmatprep.subr.mxu0 %v148
    %552 = vmatpush1.msra.mxu0 %v147
    %553 = vmatprep.subr.mxu0 %v144
    %554 = vmatpush1.msra.mxu0 %v143
    %555 = vmatprep.subr.mxu0 %v140
    %556 = vmatpush1.msra.mxu0 %v139
    %557 = vmatprep.subr.mxu0 %v136
    %558 = vmatpush1.msra.mxu0 %v135
    %559 = vmatprep.subr.mxu0 %v132
    %560 = vmatpush1.msra.mxu0 %v131
    %561 = vmatprep.subr.mxu0 %v128
    %562 = vmatpush1.msra.mxu0 %v127
    %563 = vmatprep.subr.mxu0 %v124
    %564 = vmatpush1.msra.mxu0 %v123
    %565 = vmatprep.subr.mxu0 %v120
    %566 = vmatpush1.msra.mxu0 %v119
    %567 = vmatprep.subr.mxu0 0.0
    %568 = vmatpush2.msra.mxu0 0.0
    %569 = vmatprep.subr.mxu0 0.0
    %570 = vmatpush2.msra.mxu0 0.0
    %571 = vmatprep.subr.mxu0 0.0
    %572 = vmatpush2.msra.mxu0 0.0
    %573 = vmatprep.subr.mxu0 0.0
    %574 = vmatpush2.msra.mxu0 0.0
    %575 = vmatprep.subr.mxu0 0.0
    %576 = vmatpush2.msra.mxu0 0.0
    %577 = vmatprep.subr.mxu0 0.0
    %578 = vmatpush2.msra.mxu0 0.0
    %579 = vmatprep.subr.mxu0 0.0
    %580 = vmatpush2.msra.mxu0 0.0
    %581 = vmatprep.subr.mxu0 0.0
    %582 = vmatpush2.msra.mxu0 0.0
    %583 = vmatprep.subr.mxu0 0.0
    %584 = vmatpush2.msra.mxu0 0.0
    %585 = vmatprep.subr.mxu0 0.0
    %586 = vmatpush2.msra.mxu0 0.0
    %587 = vmatprep.subr.mxu0 0.0
    %588 = vmatpush2.msra.mxu0 0.0
    %589 = vmatprep.subr.mxu0 0.0
    %590 = vmatpush2.msra.mxu0 0.0
    %591 = vmatprep.subr.mxu0 0.0
    %592 = vmatpush2.msra.mxu0 0.0
    %593 = vmatprep.subr.mxu0 0.0
    %594 = vmatpush2.msra.mxu0 0.0
    %595 = vmatprep.subr.mxu0 0.0
    %596 = vmatpush2.msra.mxu0 0.0
    %597 = vmatprep.subr.mxu0 0.0
    %598 = vmatpush2.msra.mxu0 0.0
    %599 = vmatprep.mubr.f32.mxu0 0.0
    %600 = vmatmul.mubr.f32.gmra.mxu0 %v534
    %v601 = vpop.f32.mrf.mxu0
    %v602 = vadd.f32 0.0, %v601
    %v603 = vpop.f32.mrf.mxu0
    %v604 = vadd.f32 0.0, %v603
    %605 = vdwg.mxu0
    %606 = vmatprep.subr.mxu0 %v182
    %607 = vmatpush1.msra.mxu0 %v181
    %608 = vmatprep.subr.mxu0 %v178
    %609 = vmatpush1.msra.mxu0 %v177
    %610 = vmatprep.subr.mxu0 %v174
    %611 = vmatpush1.msra.mxu0 %v173
    %612 = vmatprep.subr.mxu0 %v170
    %613 = vmatpush1.msra.mxu0 %v169
    %614 = vmatprep.subr.mxu0 %v166
    %615 = vmatpush1.msra.mxu0 %v165
    %616 = vmatprep.subr.mxu0 %v162
    %617 = vmatpush1.msra.mxu0 %v161
    %618 = vmatprep.subr.mxu0 %v158
    %619 = vmatpush1.msra.mxu0 %v157
    %620 = vmatprep.subr.mxu0 %v154
    %621 = vmatpush1.msra.mxu0 %v153
    %622 = vmatprep.subr.mxu0 %v150
    %623 = vmatpush1.msra.mxu0 %v149
    %624 = vmatprep.subr.mxu0 %v146
    %625 = vmatpush1.msra.mxu0 %v145
    %626 = vmatprep.subr.mxu0 %v142
    %627 = vmatpush1.msra.mxu0 %v141
    %628 = vmatprep.subr.mxu0 %v138
    %629 = vmatpush1.msra.mxu0 %v137
    %630 = vmatprep.subr.mxu0 %v134
    %631 = vmatpush1.msra.mxu0 %v133
    %632 = vmatprep.subr.mxu0 %v130
    %633 = vmatpush1.msra.mxu0 %v129
    %634 = vmatprep.subr.mxu0 %v126
    %635 = vmatpush1.msra.mxu0 %v125
    %636 = vmatprep.subr.mxu0 %v122
    %637 = vmatpush1.msra.mxu0 %v121
    %638 = vmatprep.subr.mxu0 0.0
    %639 = vmatpush2.msra.mxu0 0.0
    %640 = vmatprep.subr.mxu0 0.0
    %641 = vmatpush2.msra.mxu0 0.0
    %642 = vmatprep.subr.mxu0 0.0
    %643 = vmatpush2.msra.mxu0 0.0
    %644 = vmatprep.subr.mxu0 0.0
    %645 = vmatpush2.msra.mxu0 0.0
    %646 = vmatprep.subr.mxu0 0.0
    %647 = vmatpush2.msra.mxu0 0.0
    %648 = vmatprep.subr.mxu0 0.0
    %649 = vmatpush2.msra.mxu0 0.0
    %650 = vmatprep.subr.mxu0 0.0
    %651 = vmatpush2.msra.mxu0 0.0
    %652 = vmatprep.subr.mxu0 0.0
    %653 = vmatpush2.msra.mxu0 0.0
    %654 = vmatprep.subr.mxu0 0.0
    %655 = vmatpush2.msra.mxu0 0.0
    %656 = vmatprep.subr.mxu0 0.0
    %657 = vmatpush2.msra.mxu0 0.0
    %658 = vmatprep.subr.mxu0 0.0
    %659 = vmatpush2.msra.mxu0 0.0
    %660 = vmatprep.subr.mxu0 0.0
    %661 = vmatpush2.msra.mxu0 0.0
    %662 = vmatprep.subr.mxu0 0.0
    %663 = vmatpush2.msra.mxu0 0.0
    %664 = vmatprep.subr.mxu0 0.0
    %665 = vmatpush2.msra.mxu0 0.0
    %666 = vmatprep.subr.mxu0 0.0
    %667 = vmatpush2.msra.mxu0 0.0
    %668 = vmatprep.subr.mxu0 0.0
    %669 = vmatpush2.msra.mxu0 0.0
    %670 = vmatprep.mubr.f32.mxu0 0.0
    %671 = vmatmul.mubr.f32.gmra.mxu0 %v534
    %v672 = vpop.f32.mrf.mxu0
    %v673 = vadd.f32 0.0, %v672
    %v674 = vpop.f32.mrf.mxu0
    %v675 = vadd.f32 0.0, %v674
    %676 = vdwg.mxu0
    %v677 = vadd.f32 %v290, %v602
    %v678 = vadd.f32 %v292, %v604
    %v679 = vadd.f32 %v361, %v673
    %v680 = vadd.f32 %v363, %v675
    %v681 = vxor.u32 %v677, 2147483648
    %v682 = vmul.f32 %v681, 1.442695
    %v683 = vpow.pop %v682
    %v684 = vadd.f32 %v683, 1.0
    %v685 = vrcp.pop %v684
    %v686 = vmul.f32 1.0, %v685
    %v687 = vxor.u32 %v678, 2147483648
    %v688 = vmul.f32 %v687, 1.442695
    %v689 = vpow.pop %v688
    %v690 = vadd.f32 %v689, 1.0
    %v691 = vrcp.pop %v690
    %v692 = vmul.f32 1.0, %v691
    %v693 = vtanh.pop %v679
    %v694 = vxor.u32 %v680, 2147483648
    %v695 = vmul.f32 %v694, 1.442695
    %v696 = vpow.pop %v695
    %v697 = vadd.f32 %v696, 1.0
    %v698 = vrcp.pop %v697
    %v699 = vmul.f32 1.0, %v698
    %v700 = vmul.f32 %v692, %v532
    %v701 = vmul.f32 %v686, %v693
    %v702 = vadd.f32 %v700, %v701
    %v703 = vtanh.pop %v702
    %v704 = vmul.f32 %v699, %v703
    %705 = vmatprep.subr.mxu0 %v180
    %706 = vmatpush1.msra.mxu0 %v179
    %707 = vmatprep.subr.mxu0 %v176
    %708 = vmatpush1.msra.mxu0 %v175
    %709 = vmatprep.subr.mxu0 %v172
    %710 = vmatpush1.msra.mxu0 %v171
    %711 = vmatprep.subr.mxu0 %v168
    %712 = vmatpush1.msra.mxu0 %v167
    %713 = vmatprep.subr.mxu0 %v164
    %714 = vmatpush1.msra.mxu0 %v163
    %715 = vmatprep.subr.mxu0 %v160
    %716 = vmatpush1.msra.mxu0 %v159
    %717 = vmatprep.subr.mxu0 %v156
    %718 = vmatpush1.msra.mxu0 %v155
    %719 = vmatprep.subr.mxu0 %v152
    %720 = vmatpush1.msra.mxu0 %v151
    %721 = vmatprep.subr.mxu0 %v148
    %722 = vmatpush1.msra.mxu0 %v147
    %723 = vmatprep.subr.mxu0 %v144
    %724 = vmatpush1.msra.mxu0 %v143
    %725 = vmatprep.subr.mxu0 %v140
    %726 = vmatpush1.msra.mxu0 %v139
    %727 = vmatprep.subr.mxu0 %v136
    %728 = vmatpush1.msra.mxu0 %v135
    %729 = vmatprep.subr.mxu0 %v132
    %730 = vmatpush1.msra.mxu0 %v131
    %731 = vmatprep.subr.mxu0 %v128
    %732 = vmatpush1.msra.mxu0 %v127
    %733 = vmatprep.subr.mxu0 %v124
    %734 = vmatpush1.msra.mxu0 %v123
    %735 = vmatprep.subr.mxu0 %v120
    %736 = vmatpush1.msra.mxu0 %v119
    %737 = vmatprep.subr.mxu0 0.0
    %738 = vmatpush2.msra.mxu0 0.0
    %739 = vmatprep.subr.mxu0 0.0
    %740 = vmatpush2.msra.mxu0 0.0
    %741 = vmatprep.subr.mxu0 0.0
    %742 = vmatpush2.msra.mxu0 0.0
    %743 = vmatprep.subr.mxu0 0.0
    %744 = vmatpush2.msra.mxu0 0.0
    %745 = vmatprep.subr.mxu0 0.0
    %746 = vmatpush2.msra.mxu0 0.0
    %747 = vmatprep.subr.mxu0 0.0
    %748 = vmatpush2.msra.mxu0 0.0
    %749 = vmatprep.subr.mxu0 0.0
    %750 = vmatpush2.msra.mxu0 0.0
    %751 = vmatprep.subr.mxu0 0.0
    %752 = vmatpush2.msra.mxu0 0.0
    %753 = vmatprep.subr.mxu0 0.0
    %754 = vmatpush2.msra.mxu0 0.0
    %755 = vmatprep.subr.mxu0 0.0
    %756 = vmatpush2.msra.mxu0 0.0
    %757 = vmatprep.subr.mxu0 0.0
    %758 = vmatpush2.msra.mxu0 0.0
    %759 = vmatprep.subr.mxu0 0.0
    %760 = vmatpush2.msra.mxu0 0.0
    %761 = vmatprep.subr.mxu0 0.0
    %762 = vmatpush2.msra.mxu0 0.0
    %763 = vmatprep.subr.mxu0 0.0
    %764 = vmatpush2.msra.mxu0 0.0
    %765 = vmatprep.subr.mxu0 0.0
    %766 = vmatpush2.msra.mxu0 0.0
    %767 = vmatprep.subr.mxu0 0.0
    %768 = vmatpush2.msra.mxu0 0.0
    %769 = vmatprep.mubr.f32.mxu0 0.0
    %770 = vmatmul.mubr.f32.gmra.mxu0 %v704
    %v771 = vpop.f32.mrf.mxu0
    %v772 = vadd.f32 0.0, %v771
    %v773 = vpop.f32.mrf.mxu0
    %v774 = vadd.f32 0.0, %v773
    %775 = vdwg.mxu0
    %776 = vmatprep.subr.mxu0 %v182
    %777 = vmatpush1.msra.mxu0 %v181
    %778 = vmatprep.subr.mxu0 %v178
    %779 = vmatpush1.msra.mxu0 %v177
    %780 = vmatprep.subr.mxu0 %v174
    %781 = vmatpush1.msra.mxu0 %v173
    %782 = vmatprep.subr.mxu0 %v170
    %783 = vmatpush1.msra.mxu0 %v169
    %784 = vmatprep.subr.mxu0 %v166
    %785 = vmatpush1.msra.mxu0 %v165
    %786 = vmatprep.subr.mxu0 %v162
    %787 = vmatpush1.msra.mxu0 %v161
    %788 = vmatprep.subr.mxu0 %v158
    %789 = vmatpush1.msra.mxu0 %v157
    %790 = vmatprep.subr.mxu0 %v154
    %791 = vmatpush1.msra.mxu0 %v153
    %792 = vmatprep.subr.mxu0 %v150
    %793 = vmatpush1.msra.mxu0 %v149
    %794 = vmatprep.subr.mxu0 %v146
    %795 = vmatpush1.msra.mxu0 %v145
    %796 = vmatprep.subr.mxu0 %v142
    %797 = vmatpush1.msra.mxu0 %v141
    %798 = vmatprep.subr.mxu0 %v138
    %799 = vmatpush1.msra.mxu0 %v137
    %800 = vmatprep.subr.mxu0 %v134
    %801 = vmatpush1.msra.mxu0 %v133
    %802 = vmatprep.subr.mxu0 %v130
    %803 = vmatpush1.msra.mxu0 %v129
    %804 = vmatprep.subr.mxu0 %v126
    %805 = vmatpush1.msra.mxu0 %v125
    %806 = vmatprep.subr.mxu0 %v122
    %807 = vmatpush1.msra.mxu0 %v121
    %808 = vmatprep.subr.mxu0 0.0
    %809 = vmatpush2.msra.mxu0 0.0
    %810 = vmatprep.subr.mxu0 0.0
    %811 = vmatpush2.msra.mxu0 0.0
    %812 = vmatprep.subr.mxu0 0.0
    %813 = vmatpush2.msra.mxu0 0.0
    %814 = vmatprep.subr.mxu0 0.0
    %815 = vmatpush2.msra.mxu0 0.0
    %816 = vmatprep.subr.mxu0 0.0
    %817 = vmatpush2.msra.mxu0 0.0
    %818 = vmatprep.subr.mxu0 0.0
    %819 = vmatpush2.msra.mxu0 0.0
    %820 = vmatprep.subr.mxu0 0.0
    %821 = vmatpush2.msra.mxu0 0.0
    %822 = vmatprep.subr.mxu0 0.0
    %823 = vmatpush2.msra.mxu0 0.0
    %824 = vmatprep.subr.mxu0 0.0
    %825 = vmatpush2.msra.mxu0 0.0
    %826 = vmatprep.subr.mxu0 0.0
    %827 = vmatpush2.msra.mxu0 0.0
    %828 = vmatprep.subr.mxu0 0.0
    %829 = vmatpush2.msra.mxu0 0.0
    %830 = vmatprep.subr.mxu0 0.0
    %831 = vmatpush2.msra.mxu0 0.0
    %832 = vmatprep.subr.mxu0 0.0
    %833 = vmatpush2.msra.mxu0 0.0
    %834 = vmatprep.subr.mxu0 0.0
    %835 = vmatpush2.msra.mxu0 0.0
    %836 = vmatprep.subr.mxu0 0.0
    %837 = vmatpush2.msra.mxu0 0.0
    %838 = vmatprep.subr.mxu0 0.0
    %839 = vmatpush2.msra.mxu0 0.0
    %840 = vmatprep.mubr.f32.mxu0 0.0
    %841 = vmatmul.mubr.f32.gmra.mxu0 %v704
    %v842 = vpop.f32.mrf.mxu0
    %v843 = vadd.f32 0.0, %v842
    %v844 = vpop.f32.mrf.mxu0
    %v845 = vadd.f32 0.0, %v844
    %846 = vdwg.mxu0
    %v847 = vadd.f32 %v290, %v772
    %v848 = vadd.f32 %v292, %v774
    %v849 = vadd.f32 %v361, %v843
    %v850 = vadd.f32 %v363, %v845
    %v851 = vxor.u32 %v847, 2147483648
    %v852 = vmul.f32 %v851, 1.442695
    %v853 = vpow.pop %v852
    %v854 = vadd.f32 %v853, 1.0
    %v855 = vrcp.pop %v854
    %v856 = vmul.f32 1.0, %v855
    %v857 = vxor.u32 %v848, 2147483648
    %v858 = vmul.f32 %v857, 1.442695
    %v859 = vpow.pop %v858
    %v860 = vadd.f32 %v859, 1.0
    %v861 = vrcp.pop %v860
    %v862 = vmul.f32 1.0, %v861
    %v863 = vtanh.pop %v849
    %v864 = vxor.u32 %v850, 2147483648
    %v865 = vmul.f32 %v864, 1.442695
    %v866 = vpow.pop %v865
    %v867 = vadd.f32 %v866, 1.0
    %v868 = vrcp.pop %v867
    %v869 = vmul.f32 1.0, %v868
    %v870 = vmul.f32 %v862, %v702
    %v871 = vmul.f32 %v856, %v863
    %v872 = vadd.f32 %v870, %v871
    %v873 = vtanh.pop %v872
    %v874 = vmul.f32 %v869, %v873
    %875 = vmatprep.subr.mxu0 %v180
    %876 = vmatpush1.msra.mxu0 %v179
    %877 = vmatprep.subr.mxu0 %v176
    %878 = vmatpush1.msra.mxu0 %v175
    %879 = vmatprep.subr.mxu0 %v172
    %880 = vmatpush1.msra.mxu0 %v171
    %881 = vmatprep.subr.mxu0 %v168
    %882 = vmatpush1.msra.mxu0 %v167
    %883 = vmatprep.subr.mxu0 %v164
    %884 = vmatpush1.msra.mxu0 %v163
    %885 = vmatprep.subr.mxu0 %v160
    %886 = vmatpush1.msra.mxu0 %v159
    %887 = vmatprep.subr.mxu0 %v156
    %888 = vmatpush1.msra.mxu0 %v155
    %889 = vmatprep.subr.mxu0 %v152
    %890 = vmatpush1.msra.mxu0 %v151
    %891 = vmatprep.subr.mxu0 %v148
    %892 = vmatpush1.msra.mxu0 %v147
    %893 = vmatprep.subr.mxu0 %v144
    %894 = vmatpush1.msra.mxu0 %v143
    %895 = vmatprep.subr.mxu0 %v140
    %896 = vmatpush1.msra.mxu0 %v139
    %897 = vmatprep.subr.mxu0 %v136
    %898 = vmatpush1.msra.mxu0 %v135
    %899 = vmatprep.subr.mxu0 %v132
    %900 = vmatpush1.msra.mxu0 %v131
    %901 = vmatprep.subr.mxu0 %v128
    %902 = vmatpush1.msra.mxu0 %v127
    %903 = vmatprep.subr.mxu0 %v124
    %904 = vmatpush1.msra.mxu0 %v123
    %905 = vmatprep.subr.mxu0 %v120
    %906 = vmatpush1.msra.mxu0 %v119
    %907 = vmatprep.subr.mxu0 0.0
    %908 = vmatpush2.msra.mxu0 0.0
    %909 = vmatprep.subr.mxu0 0.0
    %910 = vmatpush2.msra.mxu0 0.0
    %911 = vmatprep.subr.mxu0 0.0
    %912 = vmatpush2.msra.mxu0 0.0
    %913 = vmatprep.subr.mxu0 0.0
    %914 = vmatpush2.msra.mxu0 0.0
    %915 = vmatprep.subr.mxu0 0.0
    %916 = vmatpush2.msra.mxu0 0.0
    %917 = vmatprep.subr.mxu0 0.0
    %918 = vmatpush2.msra.mxu0 0.0
    %919 = vmatprep.subr.mxu0 0.0
    %920 = vmatpush2.msra.mxu0 0.0
    %921 = vmatprep.subr.mxu0 0.0
    %922 = vmatpush2.msra.mxu0 0.0
    %923 = vmatprep.subr.mxu0 0.0
    %924 = vmatpush2.msra.mxu0 0.0
    %925 = vmatprep.subr.mxu0 0.0
    %926 = vmatpush2.msra.mxu0 0.0
    %927 = vmatprep.subr.mxu0 0.0
    %928 = vmatpush2.msra.mxu0 0.0
    %929 = vmatprep.subr.mxu0 0.0
    %930 = vmatpush2.msra.mxu0 0.0
    %931 = vmatprep.subr.mxu0 0.0
    %932 = vmatpush2.msra.mxu0 0.0
    %933 = vmatprep.subr.mxu0 0.0
    %934 = vmatpush2.msra.mxu0 0.0
    %935 = vmatprep.subr.mxu0 0.0
    %936 = vmatpush2.msra.mxu0 0.0
    %937 = vmatprep.subr.mxu0 0.0
    %938 = vmatpush2.msra.mxu0 0.0
    %939 = vmatprep.mubr.f32.mxu0 0.0
    %940 = vmatmul.mubr.f32.gmra.mxu0 %v874
    %v941 = vpop.f32.mrf.mxu0
    %v942 = vadd.f32 0.0, %v941
    %v943 = vpop.f32.mrf.mxu0
    %v944 = vadd.f32 0.0, %v943
    %945 = vdwg.mxu0
    %946 = vmatprep.subr.mxu0 %v182
    %947 = vmatpush1.msra.mxu0 %v181
    %948 = vmatprep.subr.mxu0 %v178
    %949 = vmatpush1.msra.mxu0 %v177
    %950 = vmatprep.subr.mxu0 %v174
    %951 = vmatpush1.msra.mxu0 %v173
    %952 = vmatprep.subr.mxu0 %v170
    %953 = vmatpush1.msra.mxu0 %v169
    %954 = vmatprep.subr.mxu0 %v166
    %955 = vmatpush1.msra.mxu0 %v165
    %956 = vmatprep.subr.mxu0 %v162
    %957 = vmatpush1.msra.mxu0 %v161
    %958 = vmatprep.subr.mxu0 %v158
    %959 = vmatpush1.msra.mxu0 %v157
    %960 = vmatprep.subr.mxu0 %v154
    %961 = vmatpush1.msra.mxu0 %v153
    %962 = vmatprep.subr.mxu0 %v150
    %963 = vmatpush1.msra.mxu0 %v149
    %964 = vmatprep.subr.mxu0 %v146
    %965 = vmatpush1.msra.mxu0 %v145
    %966 = vmatprep.subr.mxu0 %v142
    %967 = vmatpush1.msra.mxu0 %v141
    %968 = vmatprep.subr.mxu0 %v138
    %969 = vmatpush1.msra.mxu0 %v137
    %970 = vmatprep.subr.mxu0 %v134
    %971 = vmatpush1.msra.mxu0 %v133
    %972 = vmatprep.subr.mxu0 %v130
    %973 = vmatpush1.msra.mxu0 %v129
    %974 = vmatprep.subr.mxu0 %v126
    %975 = vmatpush1.msra.mxu0 %v125
    %976 = vmatprep.subr.mxu0 %v122
    %977 = vmatpush1.msra.mxu0 %v121
    %978 = vmatprep.subr.mxu0 0.0
    %979 = vmatpush2.msra.mxu0 0.0
    %980 = vmatprep.subr.mxu0 0.0
    %981 = vmatpush2.msra.mxu0 0.0
    %982 = vmatprep.subr.mxu0 0.0
    %983 = vmatpush2.msra.mxu0 0.0
    %984 = vmatprep.subr.mxu0 0.0
    %985 = vmatpush2.msra.mxu0 0.0
    %986 = vmatprep.subr.mxu0 0.0
    %987 = vmatpush2.msra.mxu0 0.0
    %988 = vmatprep.subr.mxu0 0.0
    %989 = vmatpush2.msra.mxu0 0.0
    %990 = vmatprep.subr.mxu0 0.0
    %991 = vmatpush2.msra.mxu0 0.0
    %992 = vmatprep.subr.mxu0 0.0
    %993 = vmatpush2.msra.mxu0 0.0
    %994 = vmatprep.subr.mxu0 0.0
    %995 = vmatpush2.msra.mxu0 0.0
    %996 = vmatprep.subr.mxu0 0.0
    %997 = vmatpush2.msra.mxu0 0.0
    %998 = vmatprep.subr.mxu0 0.0
    %999 = vmatpush2.msra.mxu0 0.0
    %1000 = vmatprep.subr.mxu0 0.0
    %1001 = vmatpush2.msra.mxu0 0.0
    %1002 = vmatprep.subr.mxu0 0.0
    %1003 = vmatpush2.msra.mxu0 0.0
    %1004 = vmatprep.subr.mxu0 0.0
    %1005 = vmatpush2.msra.mxu0 0.0
    %1006 = vmatprep.subr.mxu0 0.0
    %1007 = vmatpush2.msra.mxu0 0.0
    %1008 = vmatprep.subr.mxu0 0.0
    %1009 = vmatpush2.msra.mxu0 0.0
    %1010 = vmatprep.mubr.f32.mxu0 0.0
    %1011 = vmatmul.mubr.f32.gmra.mxu0 %v874
    %v1012 = vpop.f32.mrf.mxu0
    %v1013 = vadd.f32 0.0, %v1012
    %v1014 = vpop.f32.mrf.mxu0
    %v1015 = vadd.f32 0.0, %v1014
    %1016 = vdwg.mxu0
    %v1017 = vadd.f32 %v290, %v942
    %v1018 = vadd.f32 %v292, %v944
    %v1019 = vadd.f32 %v361, %v1013
    %v1020 = vadd.f32 %v363, %v1015
    %v1021 = vxor.u32 %v1017, 2147483648
    %v1022 = vmul.f32 %v1021, 1.442695
    %v1023 = vpow.pop %v1022
    %v1024 = vadd.f32 %v1023, 1.0
    %v1025 = vrcp.pop %v1024
    %v1026 = vmul.f32 1.0, %v1025
    %v1027 = vxor.u32 %v1018, 2147483648
    %v1028 = vmul.f32 %v1027, 1.442695
    %v1029 = vpow.pop %v1028
    %v1030 = vadd.f32 %v1029, 1.0
    %v1031 = vrcp.pop %v1030
    %v1032 = vmul.f32 1.0, %v1031
    %v1033 = vtanh.pop %v1019
    %v1034 = vxor.u32 %v1020, 2147483648
    %v1035 = vmul.f32 %v1034, 1.442695
    %v1036 = vpow.pop %v1035
    %v1037 = vadd.f32 %v1036, 1.0
    %v1038 = vrcp.pop %v1037
    %v1039 = vmul.f32 1.0, %v1038
    %v1040 = vmul.f32 %v1032, %v872
    %v1041 = vmul.f32 %v1026, %v1033
    %v1042 = vadd.f32 %v1040, %v1041
    %v1043 = vtanh.pop %v1042
    %v1044 = vmul.f32 %v1039, %v1043
    %1045 = vmatprep.subr.mxu0 %v180
    %1046 = vmatpush1.msra.mxu0 %v179
    %1047 = vmatprep.subr.mxu0 %v176
    %1048 = vmatpush1.msra.mxu0 %v175
    %1049 = vmatprep.subr.mxu0 %v172
    %1050 = vmatpush1.msra.mxu0 %v171
    %1051 = vmatprep.subr.mxu0 %v168
    %1052 = vmatpush1.msra.mxu0 %v167
    %1053 = vmatprep.subr.mxu0 %v164
    %1054 = vmatpush1.msra.mxu0 %v163
    %1055 = vmatprep.subr.mxu0 %v160
    %1056 = vmatpush1.msra.mxu0 %v159
    %1057 = vmatprep.subr.mxu0 %v156
    %1058 = vmatpush1.msra.mxu0 %v155
    %1059 = vmatprep.subr.mxu0 %v152
    %1060 = vmatpush1.msra.mxu0 %v151
    %1061 = vmatprep.subr.mxu0 %v148
    %1062 = vmatpush1.msra.mxu0 %v147
    %1063 = vmatprep.subr.mxu0 %v144
    %1064 = vmatpush1.msra.mxu0 %v143
    %1065 = vmatprep.subr.mxu0 %v140
    %1066 = vmatpush1.msra.mxu0 %v139
    %1067 = vmatprep.subr.mxu0 %v136
    %1068 = vmatpush1.msra.mxu0 %v135
    %1069 = vmatprep.subr.mxu0 %v132
    %1070 = vmatpush1.msra.mxu0 %v131
    %1071 = vmatprep.subr.mxu0 %v128
    %1072 = vmatpush1.msra.mxu0 %v127
    %1073 = vmatprep.subr.mxu0 %v124
    %1074 = vmatpush1.msra.mxu0 %v123
    %1075 = vmatprep.subr.mxu0 %v120
    %1076 = vmatpush1.msra.mxu0 %v119
    %1077 = vmatprep.subr.mxu0 0.0
    %1078 = vmatpush2.msra.mxu0 0.0
    %1079 = vmatprep.subr.mxu0 0.0
    %1080 = vmatpush2.msra.mxu0 0.0
    %1081 = vmatprep.subr.mxu0 0.0
    %1082 = vmatpush2.msra.mxu0 0.0
    %1083 = vmatprep.subr.mxu0 0.0
    %1084 = vmatpush2.msra.mxu0 0.0
    %1085 = vmatprep.subr.mxu0 0.0
    %1086 = vmatpush2.msra.mxu0 0.0
    %1087 = vmatprep.subr.mxu0 0.0
    %1088 = vmatpush2.msra.mxu0 0.0
    %1089 = vmatprep.subr.mxu0 0.0
    %1090 = vmatpush2.msra.mxu0 0.0
    %1091 = vmatprep.subr.mxu0 0.0
    %1092 = vmatpush2.msra.mxu0 0.0
    %1093 = vmatprep.subr.mxu0 0.0
    %1094 = vmatpush2.msra.mxu0 0.0
    %1095 = vmatprep.subr.mxu0 0.0
    %1096 = vmatpush2.msra.mxu0 0.0
    %1097 = vmatprep.subr.mxu0 0.0
    %1098 = vmatpush2.msra.mxu0 0.0
    %1099 = vmatprep.subr.mxu0 0.0
    %1100 = vmatpush2.msra.mxu0 0.0
    %1101 = vmatprep.subr.mxu0 0.0
    %1102 = vmatpush2.msra.mxu0 0.0
    %1103 = vmatprep.subr.mxu0 0.0
    %1104 = vmatpush2.msra.mxu0 0.0
    %1105 = vmatprep.subr.mxu0 0.0
    %1106 = vmatpush2.msra.mxu0 0.0
    %1107 = vmatprep.subr.mxu0 0.0
    %1108 = vmatpush2.msra.mxu0 0.0
    %1109 = vmatprep.mubr.f32.mxu0 0.0
    %1110 = vmatmul.mubr.f32.gmra.mxu0 %v1044
    %v1111 = vpop.f32.mrf.mxu0
    %v1112 = vadd.f32 0.0, %v1111
    %v1113 = vpop.f32.mrf.mxu0
    %v1114 = vadd.f32 0.0, %v1113
    %1115 = vdwg.mxu0
    %1116 = vmatprep.subr.mxu0 %v182
    %1117 = vmatpush1.msra.mxu0 %v181
    %1118 = vmatprep.subr.mxu0 %v178
    %1119 = vmatpush1.msra.mxu0 %v177
    %1120 = vmatprep.subr.mxu0 %v174
    %1121 = vmatpush1.msra.mxu0 %v173
    %1122 = vmatprep.subr.mxu0 %v170
    %1123 = vmatpush1.msra.mxu0 %v169
    %1124 = vmatprep.subr.mxu0 %v166
    %1125 = vmatpush1.msra.mxu0 %v165
    %1126 = vmatprep.subr.mxu0 %v162
    %1127 = vmatpush1.msra.mxu0 %v161
    %1128 = vmatprep.subr.mxu0 %v158
    %1129 = vmatpush1.msra.mxu0 %v157
    %1130 = vmatprep.subr.mxu0 %v154
    %1131 = vmatpush1.msra.mxu0 %v153
    %1132 = vmatprep.subr.mxu0 %v150
    %1133 = vmatpush1.msra.mxu0 %v149
    %1134 = vmatprep.subr.mxu0 %v146
    %1135 = vmatpush1.msra.mxu0 %v145
    %1136 = vmatprep.subr.mxu0 %v142
    %1137 = vmatpush1.msra.mxu0 %v141
    %1138 = vmatprep.subr.mxu0 %v138
    %1139 = vmatpush1.msra.mxu0 %v137
    %1140 = vmatprep.subr.mxu0 %v134
    %1141 = vmatpush1.msra.mxu0 %v133
    %1142 = vmatprep.subr.mxu0 %v130
    %1143 = vmatpush1.msra.mxu0 %v129
    %1144 = vmatprep.subr.mxu0 %v126
    %1145 = vmatpush1.msra.mxu0 %v125
    %1146 = vmatprep.subr.mxu0 %v122
    %1147 = vmatpush1.msra.mxu0 %v121
    %1148 = vmatprep.subr.mxu0 0.0
    %1149 = vmatpush2.msra.mxu0 0.0
    %1150 = vmatprep.subr.mxu0 0.0
    %1151 = vmatpush2.msra.mxu0 0.0
    %1152 = vmatprep.subr.mxu0 0.0
    %1153 = vmatpush2.msra.mxu0 0.0
    %1154 = vmatprep.subr.mxu0 0.0
    %1155 = vmatpush2.msra.mxu0 0.0
    %1156 = vmatprep.subr.mxu0 0.0
    %1157 = vmatpush2.msra.mxu0 0.0
    %1158 = vmatprep.subr.mxu0 0.0
    %1159 = vmatpush2.msra.mxu0 0.0
    %1160 = vmatprep.subr.mxu0 0.0
    %1161 = vmatpush2.msra.mxu0 0.0
    %1162 = vmatprep.subr.mxu0 0.0
    %1163 = vmatpush2.msra.mxu0 0.0
    %1164 = vmatprep.subr.mxu0 0.0
    %1165 = vmatpush2.msra.mxu0 0.0
    %1166 = vmatprep.subr.mxu0 0.0
    %1167 = vmatpush2.msra.mxu0 0.0
    %1168 = vmatprep.subr.mxu0 0.0
    %1169 = vmatpush2.msra.mxu0 0.0
    %1170 = vmatprep.subr.mxu0 0.0
    %1171 = vmatpush2.msra.mxu0 0.0
    %1172 = vmatprep.subr.mxu0 0.0
    %1173 = vmatpush2.msra.mxu0 0.0
    %1174 = vmatprep.subr.mxu0 0.0
    %1175 = vmatpush2.msra.mxu0 0.0
    %1176 = vmatprep.subr.mxu0 0.0
    %1177 = vmatpush2.msra.mxu0 0.0
    %1178 = vmatprep.subr.mxu0 0.0
    %1179 = vmatpush2.msra.mxu0 0.0
    %1180 = vmatprep.mubr.f32.mxu0 0.0
    %1181 = vmatmul.mubr.f32.gmra.mxu0 %v1044
    %v1182 = vpop.f32.mrf.mxu0
    %v1183 = vadd.f32 0.0, %v1182
    %v1184 = vpop.f32.mrf.mxu0
    %v1185 = vadd.f32 0.0, %v1184
    %1186 = vdwg.mxu0
    %v1187 = vadd.f32 %v290, %v1112
    %v1188 = vadd.f32 %v292, %v1114
    %v1189 = vadd.f32 %v361, %v1183
    %v1190 = vadd.f32 %v363, %v1185
    %v1191 = vxor.u32 %v1187, 2147483648
    %v1192 = vmul.f32 %v1191, 1.442695
    %v1193 = vpow.pop %v1192
    %v1194 = vadd.f32 %v1193, 1.0
    %v1195 = vrcp.pop %v1194
    %v1196 = vmul.f32 1.0, %v1195
    %v1197 = vxor.u32 %v1188, 2147483648
    %v1198 = vmul.f32 %v1197, 1.442695
    %v1199 = vpow.pop %v1198
    %v1200 = vadd.f32 %v1199, 1.0
    %v1201 = vrcp.pop %v1200
    %v1202 = vmul.f32 1.0, %v1201
    %v1203 = vtanh.pop %v1189
    %v1204 = vxor.u32 %v1190, 2147483648
    %v1205 = vmul.f32 %v1204, 1.442695
    %v1206 = vpow.pop %v1205
    %v1207 = vadd.f32 %v1206, 1.0
    %v1208 = vrcp.pop %v1207
    %v1209 = vmul.f32 1.0, %v1208
    %v1210 = vmul.f32 %v1202, %v1042
    %v1211 = vmul.f32 %v1196, %v1203
    %v1212 = vadd.f32 %v1210, %v1211
    %v1213 = vtanh.pop %v1212
    %v1214 = vmul.f32 %v1209, %v1213
    %1215 = vmatprep.subr.mxu0 %v180
    %1216 = vmatpush1.msra.mxu0 %v179
    %1217 = vmatprep.subr.mxu0 %v176
    %1218 = vmatpush1.msra.mxu0 %v175
    %1219 = vmatprep.subr.mxu0 %v172
    %1220 = vmatpush1.msra.mxu0 %v171
    %1221 = vmatprep.subr.mxu0 %v168
    %1222 = vmatpush1.msra.mxu0 %v167
    %1223 = vmatprep.subr.mxu0 %v164
    %1224 = vmatpush1.msra.mxu0 %v163
    %1225 = vmatprep.subr.mxu0 %v160
    %1226 = vmatpush1.msra.mxu0 %v159
    %1227 = vmatprep.subr.mxu0 %v156
    %1228 = vmatpush1.msra.mxu0 %v155
    %1229 = vmatprep.subr.mxu0 %v152
    %1230 = vmatpush1.msra.mxu0 %v151
    %1231 = vmatprep.subr.mxu0 %v148
    %1232 = vmatpush1.msra.mxu0 %v147
    %1233 = vmatprep.subr.mxu0 %v144
    %1234 = vmatpush1.msra.mxu0 %v143
    %1235 = vmatprep.subr.mxu0 %v140
    %1236 = vmatpush1.msra.mxu0 %v139
    %1237 = vmatprep.subr.mxu0 %v136
    %1238 = vmatpush1.msra.mxu0 %v135
    %1239 = vmatprep.subr.mxu0 %v132
    %1240 = vmatpush1.msra.mxu0 %v131
    %1241 = vmatprep.subr.mxu0 %v128
    %1242 = vmatpush1.msra.mxu0 %v127
    %1243 = vmatprep.subr.mxu0 %v124
    %1244 = vmatpush1.msra.mxu0 %v123
    %1245 = vmatprep.subr.mxu0 %v120
    %1246 = vmatpush1.msra.mxu0 %v119
    %1247 = vmatprep.subr.mxu0 0.0
    %1248 = vmatpush2.msra.mxu0 0.0
    %1249 = vmatprep.subr.mxu0 0.0
    %1250 = vmatpush2.msra.mxu0 0.0
    %1251 = vmatprep.subr.mxu0 0.0
    %1252 = vmatpush2.msra.mxu0 0.0
    %1253 = vmatprep.subr.mxu0 0.0
    %1254 = vmatpush2.msra.mxu0 0.0
    %1255 = vmatprep.subr.mxu0 0.0
    %1256 = vmatpush2.msra.mxu0 0.0
    %1257 = vmatprep.subr.mxu0 0.0
    %1258 = vmatpush2.msra.mxu0 0.0
    %1259 = vmatprep.subr.mxu0 0.0
    %1260 = vmatpush2.msra.mxu0 0.0
    %1261 = vmatprep.subr.mxu0 0.0
    %1262 = vmatpush2.msra.mxu0 0.0
    %1263 = vmatprep.subr.mxu0 0.0
    %1264 = vmatpush2.msra.mxu0 0.0
    %1265 = vmatprep.subr.mxu0 0.0
    %1266 = vmatpush2.msra.mxu0 0.0
    %1267 = vmatprep.subr.mxu0 0.0
    %1268 = vmatpush2.msra.mxu0 0.0
    %1269 = vmatprep.subr.mxu0 0.0
    %1270 = vmatpush2.msra.mxu0 0.0
    %1271 = vmatprep.subr.mxu0 0.0
    %1272 = vmatpush2.msra.mxu0 0.0
    %1273 = vmatprep.subr.mxu0 0.0
    %1274 = vmatpush2.msra.mxu0 0.0
    %1275 = vmatprep.subr.mxu0 0.0
    %1276 = vmatpush2.msra.mxu0 0.0
    %1277 = vmatprep.subr.mxu0 0.0
    %1278 = vmatpush2.msra.mxu0 0.0
    %1279 = vmatprep.mubr.f32.mxu0 0.0
    %1280 = vmatmul.mubr.f32.gmra.mxu0 %v1214
    %v1281 = vpop.f32.mrf.mxu0
    %v1282 = vadd.f32 0.0, %v1281
    %v1283 = vpop.f32.mrf.mxu0
    %v1284 = vadd.f32 0.0, %v1283
    %1285 = vdwg.mxu0
    %1286 = vmatprep.subr.mxu0 %v182
    %1287 = vmatpush1.msra.mxu0 %v181
    %1288 = vmatprep.subr.mxu0 %v178
    %1289 = vmatpush1.msra.mxu0 %v177
    %1290 = vmatprep.subr.mxu0 %v174
    %1291 = vmatpush1.msra.mxu0 %v173
    %1292 = vmatprep.subr.mxu0 %v170
    %1293 = vmatpush1.msra.mxu0 %v169
    %1294 = vmatprep.subr.mxu0 %v166
    %1295 = vmatpush1.msra.mxu0 %v165
    %1296 = vmatprep.subr.mxu0 %v162
    %1297 = vmatpush1.msra.mxu0 %v161
    %1298 = vmatprep.subr.mxu0 %v158
    %1299 = vmatpush1.msra.mxu0 %v157
    %1300 = vmatprep.subr.mxu0 %v154
    %1301 = vmatpush1.msra.mxu0 %v153
    %1302 = vmatprep.subr.mxu0 %v150
    %1303 = vmatpush1.msra.mxu0 %v149
    %1304 = vmatprep.subr.mxu0 %v146
    %1305 = vmatpush1.msra.mxu0 %v145
    %1306 = vmatprep.subr.mxu0 %v142
    %1307 = vmatpush1.msra.mxu0 %v141
    %1308 = vmatprep.subr.mxu0 %v138
    %1309 = vmatpush1.msra.mxu0 %v137
    %1310 = vmatprep.subr.mxu0 %v134
    %1311 = vmatpush1.msra.mxu0 %v133
    %1312 = vmatprep.subr.mxu0 %v130
    %1313 = vmatpush1.msra.mxu0 %v129
    %1314 = vmatprep.subr.mxu0 %v126
    %1315 = vmatpush1.msra.mxu0 %v125
    %1316 = vmatprep.subr.mxu0 %v122
    %1317 = vmatpush1.msra.mxu0 %v121
    %1318 = vmatprep.subr.mxu0 0.0
    %1319 = vmatpush2.msra.mxu0 0.0
    %1320 = vmatprep.subr.mxu0 0.0
    %1321 = vmatpush2.msra.mxu0 0.0
    %1322 = vmatprep.subr.mxu0 0.0
    %1323 = vmatpush2.msra.mxu0 0.0
    %1324 = vmatprep.subr.mxu0 0.0
    %1325 = vmatpush2.msra.mxu0 0.0
    %1326 = vmatprep.subr.mxu0 0.0
    %1327 = vmatpush2.msra.mxu0 0.0
    %1328 = vmatprep.subr.mxu0 0.0
    %1329 = vmatpush2.msra.mxu0 0.0
    %1330 = vmatprep.subr.mxu0 0.0
    %1331 = vmatpush2.msra.mxu0 0.0
    %1332 = vmatprep.subr.mxu0 0.0
    %1333 = vmatpush2.msra.mxu0 0.0
    %1334 = vmatprep.subr.mxu0 0.0
    %1335 = vmatpush2.msra.mxu0 0.0
    %1336 = vmatprep.subr.mxu0 0.0
    %1337 = vmatpush2.msra.mxu0 0.0
    %1338 = vmatprep.subr.mxu0 0.0
    %1339 = vmatpush2.msra.mxu0 0.0
    %1340 = vmatprep.subr.mxu0 0.0
    %1341 = vmatpush2.msra.mxu0 0.0
    %1342 = vmatprep.subr.mxu0 0.0
    %1343 = vmatpush2.msra.mxu0 0.0
    %1344 = vmatprep.subr.mxu0 0.0
    %1345 = vmatpush2.msra.mxu0 0.0
    %1346 = vmatprep.subr.mxu0 0.0
    %1347 = vmatpush2.msra.mxu0 0.0
    %1348 = vmatprep.subr.mxu0 0.0
    %1349 = vmatpush2.msra.mxu0 0.0
    %1350 = vmatprep.mubr.f32.mxu0 0.0
    %1351 = vmatmul.mubr.f32.gmra.mxu0 %v1214
    %v1352 = vpop.f32.mrf.mxu0
    %v1353 = vadd.f32 0.0, %v1352
    %v1354 = vpop.f32.mrf.mxu0
    %v1355 = vadd.f32 0.0, %v1354
    %1356 = vdwg.mxu0
    %v1357 = vadd.f32 %v290, %v1282
    %v1358 = vadd.f32 %v292, %v1284
    %v1359 = vadd.f32 %v361, %v1353
    %v1360 = vadd.f32 %v363, %v1355
    %v1361 = vxor.u32 %v1357, 2147483648
    %v1362 = vmul.f32 %v1361, 1.442695
    %v1363 = vpow.pop %v1362
    %v1364 = vadd.f32 %v1363, 1.0
    %v1365 = vrcp.pop %v1364
    %v1366 = vmul.f32 1.0, %v1365
    %v1367 = vxor.u32 %v1358, 2147483648
    %v1368 = vmul.f32 %v1367, 1.442695
    %v1369 = vpow.pop %v1368
    %v1370 = vadd.f32 %v1369, 1.0
    %v1371 = vrcp.pop %v1370
    %v1372 = vmul.f32 1.0, %v1371
    %v1373 = vtanh.pop %v1359
    %v1374 = vxor.u32 %v1360, 2147483648
    %v1375 = vmul.f32 %v1374, 1.442695
    %v1376 = vpow.pop %v1375
    %v1377 = vadd.f32 %v1376, 1.0
    %v1378 = vrcp.pop %v1377
    %v1379 = vmul.f32 1.0, %v1378
    %v1380 = vmul.f32 %v1372, %v1212
    %v1381 = vmul.f32 %v1366, %v1373
    %v1382 = vadd.f32 %v1380, %v1381
    %v1383 = vtanh.pop %v1382
    %v1384 = vmul.f32 %v1379, %v1383
    %1385 = vmatprep.subr.mxu0 %v180
    %1386 = vmatpush1.msra.mxu0 %v179
    %1387 = vmatprep.subr.mxu0 %v176
    %1388 = vmatpush1.msra.mxu0 %v175
    %1389 = vmatprep.subr.mxu0 %v172
    %1390 = vmatpush1.msra.mxu0 %v171
    %1391 = vmatprep.subr.mxu0 %v168
    %1392 = vmatpush1.msra.mxu0 %v167
    %1393 = vmatprep.subr.mxu0 %v164
    %1394 = vmatpush1.msra.mxu0 %v163
    %1395 = vmatprep.subr.mxu0 %v160
    %1396 = vmatpush1.msra.mxu0 %v159
    %1397 = vmatprep.subr.mxu0 %v156
    %1398 = vmatpush1.msra.mxu0 %v155
    %1399 = vmatprep.subr.mxu0 %v152
    %1400 = vmatpush1.msra.mxu0 %v151
    %1401 = vmatprep.subr.mxu0 %v148
    %1402 = vmatpush1.msra.mxu0 %v147
    %1403 = vmatprep.subr.mxu0 %v144
    %1404 = vmatpush1.msra.mxu0 %v143
    %1405 = vmatprep.subr.mxu0 %v140
    %1406 = vmatpush1.msra.mxu0 %v139
    %1407 = vmatprep.subr.mxu0 %v136
    %1408 = vmatpush1.msra.mxu0 %v135
    %1409 = vmatprep.subr.mxu0 %v132
    %1410 = vmatpush1.msra.mxu0 %v131
    %1411 = vmatprep.subr.mxu0 %v128
    %1412 = vmatpush1.msra.mxu0 %v127
    %1413 = vmatprep.subr.mxu0 %v124
    %1414 = vmatpush1.msra.mxu0 %v123
    %1415 = vmatprep.subr.mxu0 %v120
    %1416 = vmatpush1.msra.mxu0 %v119
    %1417 = vmatprep.subr.mxu0 0.0
    %1418 = vmatpush2.msra.mxu0 0.0
    %1419 = vmatprep.subr.mxu0 0.0
    %1420 = vmatpush2.msra.mxu0 0.0
    %1421 = vmatprep.subr.mxu0 0.0
    %1422 = vmatpush2.msra.mxu0 0.0
    %1423 = vmatprep.subr.mxu0 0.0
    %1424 = vmatpush2.msra.mxu0 0.0
    %1425 = vmatprep.subr.mxu0 0.0
    %1426 = vmatpush2.msra.mxu0 0.0
    %1427 = vmatprep.subr.mxu0 0.0
    %1428 = vmatpush2.msra.mxu0 0.0
    %1429 = vmatprep.subr.mxu0 0.0
    %1430 = vmatpush2.msra.mxu0 0.0
    %1431 = vmatprep.subr.mxu0 0.0
    %1432 = vmatpush2.msra.mxu0 0.0
    %1433 = vmatprep.subr.mxu0 0.0
    %1434 = vmatpush2.msra.mxu0 0.0
    %1435 = vmatprep.subr.mxu0 0.0
    %1436 = vmatpush2.msra.mxu0 0.0
    %1437 = vmatprep.subr.mxu0 0.0
    %1438 = vmatpush2.msra.mxu0 0.0
    %1439 = vmatprep.subr.mxu0 0.0
    %1440 = vmatpush2.msra.mxu0 0.0
    %1441 = vmatprep.subr.mxu0 0.0
    %1442 = vmatpush2.msra.mxu0 0.0
    %1443 = vmatprep.subr.mxu0 0.0
    %1444 = vmatpush2.msra.mxu0 0.0
    %1445 = vmatprep.subr.mxu0 0.0
    %1446 = vmatpush2.msra.mxu0 0.0
    %1447 = vmatprep.subr.mxu0 0.0
    %1448 = vmatpush2.msra.mxu0 0.0
    %1449 = vmatprep.mubr.f32.mxu0 0.0
    %1450 = vmatmul.mubr.f32.gmra.mxu0 %v1384
    %v1451 = vpop.f32.mrf.mxu0
    %v1452 = vadd.f32 0.0, %v1451
    %v1453 = vpop.f32.mrf.mxu0
    %v1454 = vadd.f32 0.0, %v1453
    %1455 = vdwg.mxu0
    %1456 = vmatprep.subr.mxu0 %v182
    %1457 = vmatpush1.msra.mxu0 %v181
    %1458 = vmatprep.subr.mxu0 %v178
    %1459 = vmatpush1.msra.mxu0 %v177
    %1460 = vmatprep.subr.mxu0 %v174
    %1461 = vmatpush1.msra.mxu0 %v173
    %1462 = vmatprep.subr.mxu0 %v170
    %1463 = vmatpush1.msra.mxu0 %v169
    %1464 = vmatprep.subr.mxu0 %v166
    %1465 = vmatpush1.msra.mxu0 %v165
    %1466 = vmatprep.subr.mxu0 %v162
    %1467 = vmatpush1.msra.mxu0 %v161
    %1468 = vmatprep.subr.mxu0 %v158
    %1469 = vmatpush1.msra.mxu0 %v157
    %1470 = vmatprep.subr.mxu0 %v154
    %1471 = vmatpush1.msra.mxu0 %v153
    %1472 = vmatprep.subr.mxu0 %v150
    %1473 = vmatpush1.msra.mxu0 %v149
    %1474 = vmatprep.subr.mxu0 %v146
    %1475 = vmatpush1.msra.mxu0 %v145
    %1476 = vmatprep.subr.mxu0 %v142
    %1477 = vmatpush1.msra.mxu0 %v141
    %1478 = vmatprep.subr.mxu0 %v138
    %1479 = vmatpush1.msra.mxu0 %v137
    %1480 = vmatprep.subr.mxu0 %v134
    %1481 = vmatpush1.msra.mxu0 %v133
    %1482 = vmatprep.subr.mxu0 %v130
    %1483 = vmatpush1.msra.mxu0 %v129
    %1484 = vmatprep.subr.mxu0 %v126
    %1485 = vmatpush1.msra.mxu0 %v125
    %1486 = vmatprep.subr.mxu0 %v122
    %1487 = vmatpush1.msra.mxu0 %v121
    %1488 = vmatprep.subr.mxu0 0.0
    %1489 = vmatpush2.msra.mxu0 0.0
    %1490 = vmatprep.subr.mxu0 0.0
    %1491 = vmatpush2.msra.mxu0 0.0
    %1492 = vmatprep.subr.mxu0 0.0
    %1493 = vmatpush2.msra.mxu0 0.0
    %1494 = vmatprep.subr.mxu0 0.0
    %1495 = vmatpush2.msra.mxu0 0.0
    %1496 = vmatprep.subr.mxu0 0.0
    %1497 = vmatpush2.msra.mxu0 0.0
    %1498 = vmatprep.subr.mxu0 0.0
    %1499 = vmatpush2.msra.mxu0 0.0
    %1500 = vmatprep.subr.mxu0 0.0
    %1501 = vmatpush2.msra.mxu0 0.0
    %1502 = vmatprep.subr.mxu0 0.0
    %1503 = vmatpush2.msra.mxu0 0.0
    %1504 = vmatprep.subr.mxu0 0.0
    %1505 = vmatpush2.msra.mxu0 0.0
    %1506 = vmatprep.subr.mxu0 0.0
    %1507 = vmatpush2.msra.mxu0 0.0
    %1508 = vmatprep.subr.mxu0 0.0
    %1509 = vmatpush2.msra.mxu0 0.0
    %1510 = vmatprep.subr.mxu0 0.0
    %1511 = vmatpush2.msra.mxu0 0.0
    %1512 = vmatprep.subr.mxu0 0.0
    %1513 = vmatpush2.msra.mxu0 0.0
    %1514 = vmatprep.subr.mxu0 0.0
    %1515 = vmatpush2.msra.mxu0 0.0
    %1516 = vmatprep.subr.mxu0 0.0
    %1517 = vmatpush2.msra.mxu0 0.0
    %1518 = vmatprep.subr.mxu0 0.0
    %1519 = vmatpush2.msra.mxu0 0.0
    %1520 = vmatprep.mubr.f32.mxu0 0.0
    %1521 = vmatmul.mubr.f32.gmra.mxu0 %v1384
    %v1522 = vpop.f32.mrf.mxu0
    %v1523 = vadd.f32 0.0, %v1522
    %v1524 = vpop.f32.mrf.mxu0
    %v1525 = vadd.f32 0.0, %v1524
    %1526 = vdwg.mxu0
    %v1527 = vadd.f32 %v290, %v1452
    %v1528 = vadd.f32 %v292, %v1454
    %v1529 = vadd.f32 %v361, %v1523
    %v1530 = vadd.f32 %v363, %v1525
    %v1531 = vxor.u32 %v1527, 2147483648
    %v1532 = vmul.f32 %v1531, 1.442695
    %v1533 = vpow.pop %v1532
    %v1534 = vadd.f32 %v1533, 1.0
    %v1535 = vrcp.pop %v1534
    %v1536 = vmul.f32 1.0, %v1535
    %v1537 = vxor.u32 %v1528, 2147483648
    %v1538 = vmul.f32 %v1537, 1.442695
    %v1539 = vpow.pop %v1538
    %v1540 = vadd.f32 %v1539, 1.0
    %v1541 = vrcp.pop %v1540
    %v1542 = vmul.f32 1.0, %v1541
    %v1543 = vtanh.pop %v1529
    %v1544 = vxor.u32 %v1530, 2147483648
    %v1545 = vmul.f32 %v1544, 1.442695
    %v1546 = vpow.pop %v1545
    %v1547 = vadd.f32 %v1546, 1.0
    %v1548 = vrcp.pop %v1547
    %v1549 = vmul.f32 1.0, %v1548
    %v1550 = vmul.f32 %v1542, %v1382
    %v1551 = vmul.f32 %v1536, %v1543
    %v1552 = vadd.f32 %v1550, %v1551
    %v1553 = vtanh.pop %v1552
    %v1554 = vmul.f32 %v1549, %v1553
    %1555 = vmatprep.subr.mxu0 %v180
    %1556 = vmatpush1.msra.mxu0 %v179
    %1557 = vmatprep.subr.mxu0 %v176
    %1558 = vmatpush1.msra.mxu0 %v175
    %1559 = vmatprep.subr.mxu0 %v172
    %1560 = vmatpush1.msra.mxu0 %v171
    %1561 = vmatprep.subr.mxu0 %v168
    %1562 = vmatpush1.msra.mxu0 %v167
    %1563 = vmatprep.subr.mxu0 %v164
    %1564 = vmatpush1.msra.mxu0 %v163
    %1565 = vmatprep.subr.mxu0 %v160
    %1566 = vmatpush1.msra.mxu0 %v159
    %1567 = vmatprep.subr.mxu0 %v156
    %1568 = vmatpush1.msra.mxu0 %v155
    %1569 = vmatprep.subr.mxu0 %v152
    %1570 = vmatpush1.msra.mxu0 %v151
    %1571 = vmatprep.subr.mxu0 %v148
    %1572 = vmatpush1.msra.mxu0 %v147
    %1573 = vmatprep.subr.mxu0 %v144
    %1574 = vmatpush1.msra.mxu0 %v143
    %1575 = vmatprep.subr.mxu0 %v140
    %1576 = vmatpush1.msra.mxu0 %v139
    %1577 = vmatprep.subr.mxu0 %v136
    %1578 = vmatpush1.msra.mxu0 %v135
    %1579 = vmatprep.subr.mxu0 %v132
    %1580 = vmatpush1.msra.mxu0 %v131
    %1581 = vmatprep.subr.mxu0 %v128
    %1582 = vmatpush1.msra.mxu0 %v127
    %1583 = vmatprep.subr.mxu0 %v124
    %1584 = vmatpush1.msra.mxu0 %v123
    %1585 = vmatprep.subr.mxu0 %v120
    %1586 = vmatpush1.msra.mxu0 %v119
    %1587 = vmatprep.subr.mxu0 0.0
    %1588 = vmatpush2.msra.mxu0 0.0
    %1589 = vmatprep.subr.mxu0 0.0
    %1590 = vmatpush2.msra.mxu0 0.0
    %1591 = vmatprep.subr.mxu0 0.0
    %1592 = vmatpush2.msra.mxu0 0.0
    %1593 = vmatprep.subr.mxu0 0.0
    %1594 = vmatpush2.msra.mxu0 0.0
    %1595 = vmatprep.subr.mxu0 0.0
    %1596 = vmatpush2.msra.mxu0 0.0
    %1597 = vmatprep.subr.mxu0 0.0
    %1598 = vmatpush2.msra.mxu0 0.0
    %1599 = vmatprep.subr.mxu0 0.0
    %1600 = vmatpush2.msra.mxu0 0.0
    %1601 = vmatprep.subr.mxu0 0.0
    %1602 = vmatpush2.msra.mxu0 0.0
    %1603 = vmatprep.subr.mxu0 0.0
    %1604 = vmatpush2.msra.mxu0 0.0
    %1605 = vmatprep.subr.mxu0 0.0
    %1606 = vmatpush2.msra.mxu0 0.0
    %1607 = vmatprep.subr.mxu0 0.0
    %1608 = vmatpush2.msra.mxu0 0.0
    %1609 = vmatprep.subr.mxu0 0.0
    %1610 = vmatpush2.msra.mxu0 0.0
    %1611 = vmatprep.subr.mxu0 0.0
    %1612 = vmatpush2.msra.mxu0 0.0
    %1613 = vmatprep.subr.mxu0 0.0
    %1614 = vmatpush2.msra.mxu0 0.0
    %1615 = vmatprep.subr.mxu0 0.0
    %1616 = vmatpush2.msra.mxu0 0.0
    %1617 = vmatprep.subr.mxu0 0.0
    %1618 = vmatpush2.msra.mxu0 0.0
    %1619 = vmatprep.mubr.f32.mxu0 0.0
    %1620 = vmatmul.mubr.f32.gmra.mxu0 %v1554
    %v1621 = vpop.f32.mrf.mxu0
    %v1622 = vadd.f32 0.0, %v1621
    %v1623 = vpop.f32.mrf.mxu0
    %v1624 = vadd.f32 0.0, %v1623
    %1625 = vdwg.mxu0
    %1626 = vmatprep.subr.mxu0 %v182
    %1627 = vmatpush1.msra.mxu0 %v181
    %1628 = vmatprep.subr.mxu0 %v178
    %1629 = vmatpush1.msra.mxu0 %v177
    %1630 = vmatprep.subr.mxu0 %v174
    %1631 = vmatpush1.msra.mxu0 %v173
    %1632 = vmatprep.subr.mxu0 %v170
    %1633 = vmatpush1.msra.mxu0 %v169
    %1634 = vmatprep.subr.mxu0 %v166
    %1635 = vmatpush1.msra.mxu0 %v165
    %1636 = vmatprep.subr.mxu0 %v162
    %1637 = vmatpush1.msra.mxu0 %v161
    %1638 = vmatprep.subr.mxu0 %v158
    %1639 = vmatpush1.msra.mxu0 %v157
    %1640 = vmatprep.subr.mxu0 %v154
    %1641 = vmatpush1.msra.mxu0 %v153
    %1642 = vmatprep.subr.mxu0 %v150
    %1643 = vmatpush1.msra.mxu0 %v149
    %1644 = vmatprep.subr.mxu0 %v146
    %1645 = vmatpush1.msra.mxu0 %v145
    %1646 = vmatprep.subr.mxu0 %v142
    %1647 = vmatpush1.msra.mxu0 %v141
    %1648 = vmatprep.subr.mxu0 %v138
    %1649 = vmatpush1.msra.mxu0 %v137
    %1650 = vmatprep.subr.mxu0 %v134
    %1651 = vmatpush1.msra.mxu0 %v133
    %1652 = vmatprep.subr.mxu0 %v130
    %1653 = vmatpush1.msra.mxu0 %v129
    %1654 = vmatprep.subr.mxu0 %v126
    %1655 = vmatpush1.msra.mxu0 %v125
    %1656 = vmatprep.subr.mxu0 %v122
    %1657 = vmatpush1.msra.mxu0 %v121
    %1658 = vmatprep.subr.mxu0 0.0
    %1659 = vmatpush2.msra.mxu0 0.0
    %1660 = vmatprep.subr.mxu0 0.0
    %1661 = vmatpush2.msra.mxu0 0.0
    %1662 = vmatprep.subr.mxu0 0.0
    %1663 = vmatpush2.msra.mxu0 0.0
    %1664 = vmatprep.subr.mxu0 0.0
    %1665 = vmatpush2.msra.mxu0 0.0
    %1666 = vmatprep.subr.mxu0 0.0
    %1667 = vmatpush2.msra.mxu0 0.0
    %1668 = vmatprep.subr.mxu0 0.0
    %1669 = vmatpush2.msra.mxu0 0.0
    %1670 = vmatprep.subr.mxu0 0.0
    %1671 = vmatpush2.msra.mxu0 0.0
    %1672 = vmatprep.subr.mxu0 0.0
    %1673 = vmatpush2.msra.mxu0 0.0
    %1674 = vmatprep.subr.mxu0 0.0
    %1675 = vmatpush2.msra.mxu0 0.0
    %1676 = vmatprep.subr.mxu0 0.0
    %1677 = vmatpush2.msra.mxu0 0.0
    %1678 = vmatprep.subr.mxu0 0.0
    %1679 = vmatpush2.msra.mxu0 0.0
    %1680 = vmatprep.subr.mxu0 0.0
    %1681 = vmatpush2.msra.mxu0 0.0
    %1682 = vmatprep.subr.mxu0 0.0
    %1683 = vmatpush2.msra.mxu0 0.0
    %1684 = vmatprep.subr.mxu0 0.0
    %1685 = vmatpush2.msra.mxu0 0.0
    %1686 = vmatprep.subr.mxu0 0.0
    %1687 = vmatpush2.msra.mxu0 0.0
    %1688 = vmatprep.subr.mxu0 0.0
    %1689 = vmatpush2.msra.mxu0 0.0
    %1690 = vmatprep.mubr.f32.mxu0 0.0
    %1691 = vmatmul.mubr.f32.gmra.mxu0 %v1554
    %v1692 = vpop.f32.mrf.mxu0
    %v1693 = vadd.f32 0.0, %v1692
    %v1694 = vpop.f32.mrf.mxu0
    %v1695 = vadd.f32 0.0, %v1694
    %1696 = vdwg.mxu0
    %v1697 = vadd.f32 %v290, %v1622
    %v1698 = vadd.f32 %v292, %v1624
    %v1699 = vadd.f32 %v361, %v1693
    %v1700 = vadd.f32 %v363, %v1695
    %v1701 = vxor.u32 %v1697, 2147483648
    %v1702 = vmul.f32 %v1701, 1.442695
    %v1703 = vpow.pop %v1702
    %v1704 = vadd.f32 %v1703, 1.0
    %v1705 = vrcp.pop %v1704
    %v1706 = vmul.f32 1.0, %v1705
    %v1707 = vxor.u32 %v1698, 2147483648
    %v1708 = vmul.f32 %v1707, 1.442695
    %v1709 = vpow.pop %v1708
    %v1710 = vadd.f32 %v1709, 1.0
    %v1711 = vrcp.pop %v1710
    %v1712 = vmul.f32 1.0, %v1711
    %v1713 = vtanh.pop %v1699
    %v1714 = vxor.u32 %v1700, 2147483648
    %v1715 = vmul.f32 %v1714, 1.442695
    %v1716 = vpow.pop %v1715
    %v1717 = vadd.f32 %v1716, 1.0
    %v1718 = vrcp.pop %v1717
    %v1719 = vmul.f32 1.0, %v1718
    %v1720 = vmul.f32 %v1712, %v1552
    %v1721 = vmul.f32 %v1706, %v1713
    %v1722 = vadd.f32 %v1720, %v1721
    %v1723 = vtanh.pop %v1722
    %v1724 = vmul.f32 %v1719, %v1723
    %1725 = vmatprep.subr.mxu0 %v180
    %1726 = vmatpush1.msra.mxu0 %v179
    %1727 = vmatprep.subr.mxu0 %v176
    %1728 = vmatpush1.msra.mxu0 %v175
    %1729 = vmatprep.subr.mxu0 %v172
    %1730 = vmatpush1.msra.mxu0 %v171
    %1731 = vmatprep.subr.mxu0 %v168
    %1732 = vmatpush1.msra.mxu0 %v167
    %1733 = vmatprep.subr.mxu0 %v164
    %1734 = vmatpush1.msra.mxu0 %v163
    %1735 = vmatprep.subr.mxu0 %v160
    %1736 = vmatpush1.msra.mxu0 %v159
    %1737 = vmatprep.subr.mxu0 %v156
    %1738 = vmatpush1.msra.mxu0 %v155
    %1739 = vmatprep.subr.mxu0 %v152
    %1740 = vmatpush1.msra.mxu0 %v151
    %1741 = vmatprep.subr.mxu0 %v148
    %1742 = vmatpush1.msra.mxu0 %v147
    %1743 = vmatprep.subr.mxu0 %v144
    %1744 = vmatpush1.msra.mxu0 %v143
    %1745 = vmatprep.subr.mxu0 %v140
    %1746 = vmatpush1.msra.mxu0 %v139
    %1747 = vmatprep.subr.mxu0 %v136
    %1748 = vmatpush1.msra.mxu0 %v135
    %1749 = vmatprep.subr.mxu0 %v132
    %1750 = vmatpush1.msra.mxu0 %v131
    %1751 = vmatprep.subr.mxu0 %v128
    %1752 = vmatpush1.msra.mxu0 %v127
    %1753 = vmatprep.subr.mxu0 %v124
    %1754 = vmatpush1.msra.mxu0 %v123
    %1755 = vmatprep.subr.mxu0 %v120
    %1756 = vmatpush1.msra.mxu0 %v119
    %1757 = vmatprep.subr.mxu0 0.0
    %1758 = vmatpush2.msra.mxu0 0.0
    %1759 = vmatprep.subr.mxu0 0.0
    %1760 = vmatpush2.msra.mxu0 0.0
    %1761 = vmatprep.subr.mxu0 0.0
    %1762 = vmatpush2.msra.mxu0 0.0
    %1763 = vmatprep.subr.mxu0 0.0
    %1764 = vmatpush2.msra.mxu0 0.0
    %1765 = vmatprep.subr.mxu0 0.0
    %1766 = vmatpush2.msra.mxu0 0.0
    %1767 = vmatprep.subr.mxu0 0.0
    %1768 = vmatpush2.msra.mxu0 0.0
    %1769 = vmatprep.subr.mxu0 0.0
    %1770 = vmatpush2.msra.mxu0 0.0
    %1771 = vmatprep.subr.mxu0 0.0
    %1772 = vmatpush2.msra.mxu0 0.0
    %1773 = vmatprep.subr.mxu0 0.0
    %1774 = vmatpush2.msra.mxu0 0.0
    %1775 = vmatprep.subr.mxu0 0.0
    %1776 = vmatpush2.msra.mxu0 0.0
    %1777 = vmatprep.subr.mxu0 0.0
    %1778 = vmatpush2.msra.mxu0 0.0
    %1779 = vmatprep.subr.mxu0 0.0
    %1780 = vmatpush2.msra.mxu0 0.0
    %1781 = vmatprep.subr.mxu0 0.0
    %1782 = vmatpush2.msra.mxu0 0.0
    %1783 = vmatprep.subr.mxu0 0.0
    %1784 = vmatpush2.msra.mxu0 0.0
    %1785 = vmatprep.subr.mxu0 0.0
    %1786 = vmatpush2.msra.mxu0 0.0
    %1787 = vmatprep.subr.mxu0 0.0
    %1788 = vmatpush2.msra.mxu0 0.0
    %1789 = vmatprep.mubr.f32.mxu0 0.0
    %1790 = vmatmul.mubr.f32.gmra.mxu0 %v1724
    %v1791 = vpop.f32.mrf.mxu0
    %v1792 = vadd.f32 0.0, %v1791
    %v1793 = vpop.f32.mrf.mxu0
    %v1794 = vadd.f32 0.0, %v1793
    %1795 = vdwg.mxu0
    %1796 = vmatprep.subr.mxu0 %v182
    %1797 = vmatpush1.msra.mxu0 %v181
    %1798 = vmatprep.subr.mxu0 %v178
    %1799 = vmatpush1.msra.mxu0 %v177
    %1800 = vmatprep.subr.mxu0 %v174
    %1801 = vmatpush1.msra.mxu0 %v173
    %1802 = vmatprep.subr.mxu0 %v170
    %1803 = vmatpush1.msra.mxu0 %v169
    %1804 = vmatprep.subr.mxu0 %v166
    %1805 = vmatpush1.msra.mxu0 %v165
    %1806 = vmatprep.subr.mxu0 %v162
    %1807 = vmatpush1.msra.mxu0 %v161
    %1808 = vmatprep.subr.mxu0 %v158
    %1809 = vmatpush1.msra.mxu0 %v157
    %1810 = vmatprep.subr.mxu0 %v154
    %1811 = vmatpush1.msra.mxu0 %v153
    %1812 = vmatprep.subr.mxu0 %v150
    %1813 = vmatpush1.msra.mxu0 %v149
    %1814 = vmatprep.subr.mxu0 %v146
    %1815 = vmatpush1.msra.mxu0 %v145
    %1816 = vmatprep.subr.mxu0 %v142
    %1817 = vmatpush1.msra.mxu0 %v141
    %1818 = vmatprep.subr.mxu0 %v138
    %1819 = vmatpush1.msra.mxu0 %v137
    %1820 = vmatprep.subr.mxu0 %v134
    %1821 = vmatpush1.msra.mxu0 %v133
    %1822 = vmatprep.subr.mxu0 %v130
    %1823 = vmatpush1.msra.mxu0 %v129
    %1824 = vmatprep.subr.mxu0 %v126
    %1825 = vmatpush1.msra.mxu0 %v125
    %1826 = vmatprep.subr.mxu0 %v122
    %1827 = vmatpush1.msra.mxu0 %v121
    %1828 = vmatprep.subr.mxu0 0.0
    %1829 = vmatpush2.msra.mxu0 0.0
    %1830 = vmatprep.subr.mxu0 0.0
    %1831 = vmatpush2.msra.mxu0 0.0
    %1832 = vmatprep.subr.mxu0 0.0
    %1833 = vmatpush2.msra.mxu0 0.0
    %1834 = vmatprep.subr.mxu0 0.0
    %1835 = vmatpush2.msra.mxu0 0.0
    %1836 = vmatprep.subr.mxu0 0.0
    %1837 = vmatpush2.msra.mxu0 0.0
    %1838 = vmatprep.subr.mxu0 0.0
    %1839 = vmatpush2.msra.mxu0 0.0
    %1840 = vmatprep.subr.mxu0 0.0
    %1841 = vmatpush2.msra.mxu0 0.0
    %1842 = vmatprep.subr.mxu0 0.0
    %1843 = vmatpush2.msra.mxu0 0.0
    %1844 = vmatprep.subr.mxu0 0.0
    %1845 = vmatpush2.msra.mxu0 0.0
    %1846 = vmatprep.subr.mxu0 0.0
    %1847 = vmatpush2.msra.mxu0 0.0
    %1848 = vmatprep.subr.mxu0 0.0
    %1849 = vmatpush2.msra.mxu0 0.0
    %1850 = vmatprep.subr.mxu0 0.0
    %1851 = vmatpush2.msra.mxu0 0.0
    %1852 = vmatprep.subr.mxu0 0.0
    %1853 = vmatpush2.msra.mxu0 0.0
    %1854 = vmatprep.subr.mxu0 0.0
    %1855 = vmatpush2.msra.mxu0 0.0
    %1856 = vmatprep.subr.mxu0 0.0
    %1857 = vmatpush2.msra.mxu0 0.0
    %1858 = vmatprep.subr.mxu0 0.0
    %1859 = vmatpush2.msra.mxu0 0.0
    %1860 = vmatprep.mubr.f32.mxu0 0.0
    %1861 = vmatmul.mubr.f32.gmra.mxu0 %v1724
    %v1862 = vpop.f32.mrf.mxu0
    %v1863 = vadd.f32 0.0, %v1862
    %v1864 = vpop.f32.mrf.mxu0
    %v1865 = vadd.f32 0.0, %v1864
    %1866 = vdwg.mxu0
    %v1867 = vadd.f32 %v290, %v1792
    %v1868 = vadd.f32 %v292, %v1794
    %v1869 = vadd.f32 %v361, %v1863
    %v1870 = vadd.f32 %v363, %v1865
    %v1871 = vxor.u32 %v1867, 2147483648
    %v1872 = vmul.f32 %v1871, 1.442695
    %v1873 = vpow.pop %v1872
    %v1874 = vadd.f32 %v1873, 1.0
    %v1875 = vrcp.pop %v1874
    %v1876 = vmul.f32 1.0, %v1875
    %v1877 = vxor.u32 %v1868, 2147483648
    %v1878 = vmul.f32 %v1877, 1.442695
    %v1879 = vpow.pop %v1878
    %v1880 = vadd.f32 %v1879, 1.0
    %v1881 = vrcp.pop %v1880
    %v1882 = vmul.f32 1.0, %v1881
    %v1883 = vtanh.pop %v1869
    %v1884 = vxor.u32 %v1870, 2147483648
    %v1885 = vmul.f32 %v1884, 1.442695
    %v1886 = vpow.pop %v1885
    %v1887 = vadd.f32 %v1886, 1.0
    %v1888 = vrcp.pop %v1887
    %v1889 = vmul.f32 1.0, %v1888
    %v1890 = vmul.f32 %v1882, %v1722
    %v1891 = vmul.f32 %v1876, %v1883
    %v1892 = vadd.f32 %v1890, %v1891
    %v1893 = vtanh.pop %v1892
    %v1894 = vmul.f32 %v1889, %v1893
    %1895 = vmatprep.subr.mxu0 %v180
    %1896 = vmatpush1.msra.mxu0 %v179
    %1897 = vmatprep.subr.mxu0 %v176
    %1898 = vmatpush1.msra.mxu0 %v175
    %1899 = vmatprep.subr.mxu0 %v172
    %1900 = vmatpush1.msra.mxu0 %v171
    %1901 = vmatprep.subr.mxu0 %v168
    %1902 = vmatpush1.msra.mxu0 %v167
    %1903 = vmatprep.subr.mxu0 %v164
    %1904 = vmatpush1.msra.mxu0 %v163
    %1905 = vmatprep.subr.mxu0 %v160
    %1906 = vmatpush1.msra.mxu0 %v159
    %1907 = vmatprep.subr.mxu0 %v156
    %1908 = vmatpush1.msra.mxu0 %v155
    %1909 = vmatprep.subr.mxu0 %v152
    %1910 = vmatpush1.msra.mxu0 %v151
    %1911 = vmatprep.subr.mxu0 %v148
    %1912 = vmatpush1.msra.mxu0 %v147
    %1913 = vmatprep.subr.mxu0 %v144
    %1914 = vmatpush1.msra.mxu0 %v143
    %1915 = vmatprep.subr.mxu0 %v140
    %1916 = vmatpush1.msra.mxu0 %v139
    %1917 = vmatprep.subr.mxu0 %v136
    %1918 = vmatpush1.msra.mxu0 %v135
    %1919 = vmatprep.subr.mxu0 %v132
    %1920 = vmatpush1.msra.mxu0 %v131
    %1921 = vmatprep.subr.mxu0 %v128
    %1922 = vmatpush1.msra.mxu0 %v127
    %1923 = vmatprep.subr.mxu0 %v124
    %1924 = vmatpush1.msra.mxu0 %v123
    %1925 = vmatprep.subr.mxu0 %v120
    %1926 = vmatpush1.msra.mxu0 %v119
    %1927 = vmatprep.subr.mxu0 0.0
    %1928 = vmatpush2.msra.mxu0 0.0
    %1929 = vmatprep.subr.mxu0 0.0
    %1930 = vmatpush2.msra.mxu0 0.0
    %1931 = vmatprep.subr.mxu0 0.0
    %1932 = vmatpush2.msra.mxu0 0.0
    %1933 = vmatprep.subr.mxu0 0.0
    %1934 = vmatpush2.msra.mxu0 0.0
    %1935 = vmatprep.subr.mxu0 0.0
    %1936 = vmatpush2.msra.mxu0 0.0
    %1937 = vmatprep.subr.mxu0 0.0
    %1938 = vmatpush2.msra.mxu0 0.0
    %1939 = vmatprep.subr.mxu0 0.0
    %1940 = vmatpush2.msra.mxu0 0.0
    %1941 = vmatprep.subr.mxu0 0.0
    %1942 = vmatpush2.msra.mxu0 0.0
    %1943 = vmatprep.subr.mxu0 0.0
    %1944 = vmatpush2.msra.mxu0 0.0
    %1945 = vmatprep.subr.mxu0 0.0
    %1946 = vmatpush2.msra.mxu0 0.0
    %1947 = vmatprep.subr.mxu0 0.0
    %1948 = vmatpush2.msra.mxu0 0.0
    %1949 = vmatprep.subr.mxu0 0.0
    %1950 = vmatpush2.msra.mxu0 0.0
    %1951 = vmatprep.subr.mxu0 0.0
    %1952 = vmatpush2.msra.mxu0 0.0
    %1953 = vmatprep.subr.mxu0 0.0
    %1954 = vmatpush2.msra.mxu0 0.0
    %1955 = vmatprep.subr.mxu0 0.0
    %1956 = vmatpush2.msra.mxu0 0.0
    %1957 = vmatprep.subr.mxu0 0.0
    %1958 = vmatpush2.msra.mxu0 0.0
    %1959 = vmatprep.mubr.f32.mxu0 0.0
    %1960 = vmatmul.mubr.f32.gmra.mxu0 %v1894
    %v1961 = vpop.f32.mrf.mxu0
    %v1962 = vadd.f32 0.0, %v1961
    %v1963 = vpop.f32.mrf.mxu0
    %v1964 = vadd.f32 0.0, %v1963
    %1965 = vdwg.mxu0
    %1966 = vmatprep.subr.mxu0 %v182
    %1967 = vmatpush1.msra.mxu0 %v181
    %1968 = vmatprep.subr.mxu0 %v178
    %1969 = vmatpush1.msra.mxu0 %v177
    %1970 = vmatprep.subr.mxu0 %v174
    %1971 = vmatpush1.msra.mxu0 %v173
    %1972 = vmatprep.subr.mxu0 %v170
    %1973 = vmatpush1.msra.mxu0 %v169
    %1974 = vmatprep.subr.mxu0 %v166
    %1975 = vmatpush1.msra.mxu0 %v165
    %1976 = vmatprep.subr.mxu0 %v162
    %1977 = vmatpush1.msra.mxu0 %v161
    %1978 = vmatprep.subr.mxu0 %v158
    %1979 = vmatpush1.msra.mxu0 %v157
    %1980 = vmatprep.subr.mxu0 %v154
    %1981 = vmatpush1.msra.mxu0 %v153
    %1982 = vmatprep.subr.mxu0 %v150
    %1983 = vmatpush1.msra.mxu0 %v149
    %1984 = vmatprep.subr.mxu0 %v146
    %1985 = vmatpush1.msra.mxu0 %v145
    %1986 = vmatprep.subr.mxu0 %v142
    %1987 = vmatpush1.msra.mxu0 %v141
    %1988 = vmatprep.subr.mxu0 %v138
    %1989 = vmatpush1.msra.mxu0 %v137
    %1990 = vmatprep.subr.mxu0 %v134
    %1991 = vmatpush1.msra.mxu0 %v133
    %1992 = vmatprep.subr.mxu0 %v130
    %1993 = vmatpush1.msra.mxu0 %v129
    %1994 = vmatprep.subr.mxu0 %v126
    %1995 = vmatpush1.msra.mxu0 %v125
    %1996 = vmatprep.subr.mxu0 %v122
    %1997 = vmatpush1.msra.mxu0 %v121
    %1998 = vmatprep.subr.mxu0 0.0
    %1999 = vmatpush2.msra.mxu0 0.0
    %2000 = vmatprep.subr.mxu0 0.0
    %2001 = vmatpush2.msra.mxu0 0.0
    %2002 = vmatprep.subr.mxu0 0.0
    %2003 = vmatpush2.msra.mxu0 0.0
    %2004 = vmatprep.subr.mxu0 0.0
    %2005 = vmatpush2.msra.mxu0 0.0
    %2006 = vmatprep.subr.mxu0 0.0
    %2007 = vmatpush2.msra.mxu0 0.0
    %2008 = vmatprep.subr.mxu0 0.0
    %2009 = vmatpush2.msra.mxu0 0.0
    %2010 = vmatprep.subr.mxu0 0.0
    %2011 = vmatpush2.msra.mxu0 0.0
    %2012 = vmatprep.subr.mxu0 0.0
    %2013 = vmatpush2.msra.mxu0 0.0
    %2014 = vmatprep.subr.mxu0 0.0
    %2015 = vmatpush2.msra.mxu0 0.0
    %2016 = vmatprep.subr.mxu0 0.0
    %2017 = vmatpush2.msra.mxu0 0.0
    %2018 = vmatprep.subr.mxu0 0.0
    %2019 = vmatpush2.msra.mxu0 0.0
    %2020 = vmatprep.subr.mxu0 0.0
    %2021 = vmatpush2.msra.mxu0 0.0
    %2022 = vmatprep.subr.mxu0 0.0
    %2023 = vmatpush2.msra.mxu0 0.0
    %2024 = vmatprep.subr.mxu0 0.0
    %2025 = vmatpush2.msra.mxu0 0.0
    %2026 = vmatprep.subr.mxu0 0.0
    %2027 = vmatpush2.msra.mxu0 0.0
    %2028 = vmatprep.subr.mxu0 0.0
    %2029 = vmatpush2.msra.mxu0 0.0
    %2030 = vmatprep.mubr.f32.mxu0 0.0
    %2031 = vmatmul.mubr.f32.gmra.mxu0 %v1894
    %v2032 = vpop.f32.mrf.mxu0
    %v2033 = vadd.f32 0.0, %v2032
    %v2034 = vpop.f32.mrf.mxu0
    %v2035 = vadd.f32 0.0, %v2034
    %2036 = vdwg.mxu0
    %v2037 = vadd.f32 %v290, %v1962
    %v2038 = vadd.f32 %v292, %v1964
    %v2039 = vadd.f32 %v361, %v2033
    %v2040 = vadd.f32 %v363, %v2035
    %v2041 = vxor.u32 %v2037, 2147483648
    %v2042 = vmul.f32 %v2041, 1.442695
    %v2043 = vpow.pop %v2042
    %v2044 = vadd.f32 %v2043, 1.0
    %v2045 = vrcp.pop %v2044
    %v2046 = vmul.f32 1.0, %v2045
    %v2047 = vxor.u32 %v2038, 2147483648
    %v2048 = vmul.f32 %v2047, 1.442695
    %v2049 = vpow.pop %v2048
    %v2050 = vadd.f32 %v2049, 1.0
    %v2051 = vrcp.pop %v2050
    %v2052 = vmul.f32 1.0, %v2051
    %v2053 = vtanh.pop %v2039
    %v2054 = vxor.u32 %v2040, 2147483648
    %v2055 = vmul.f32 %v2054, 1.442695
    %v2056 = vpow.pop %v2055
    %v2057 = vadd.f32 %v2056, 1.0
    %v2058 = vrcp.pop %v2057
    %v2059 = vmul.f32 1.0, %v2058
    %v2060 = vmul.f32 %v2052, %v1892
    %v2061 = vmul.f32 %v2046, %v2053
    %v2062 = vadd.f32 %v2060, %v2061
    %v2063 = vtanh.pop %v2062
    %v2064 = vmul.f32 %v2059, %v2063
    %v2065 = vlaneseq
    %v2066 = vshrl.u32 %v2065, 7
    %v2067 = vsub.s32 0, %v2066
    %v2068 = vrot.slane %v201, %v2067
    %2069 = vmatprep.subr.mxu0 0.0
    %2070 = vmatpush1.msra.mxu0 %v200
    %2071 = vmatprep.subr.mxu0 0.0
    %2072 = vmatpush1.msra.mxu0 %v199
    %2073 = vmatprep.subr.mxu0 0.0
    %2074 = vmatpush1.msra.mxu0 %v198
    %2075 = vmatprep.subr.mxu0 0.0
    %2076 = vmatpush1.msra.mxu0 %v197
    %2077 = vmatprep.subr.mxu0 0.0
    %2078 = vmatpush1.msra.mxu0 %v196
    %2079 = vmatprep.subr.mxu0 0.0
    %2080 = vmatpush1.msra.mxu0 %v195
    %2081 = vmatprep.subr.mxu0 0.0
    %2082 = vmatpush1.msra.mxu0 %v194
    %2083 = vmatprep.subr.mxu0 0.0
    %2084 = vmatpush1.msra.mxu0 %v193
    %2085 = vmatprep.subr.mxu0 0.0
    %2086 = vmatpush1.msra.mxu0 %v192
    %2087 = vmatprep.subr.mxu0 0.0
    %2088 = vmatpush1.msra.mxu0 %v191
    %2089 = vmatprep.subr.mxu0 0.0
    %2090 = vmatpush1.msra.mxu0 %v190
    %2091 = vmatprep.subr.mxu0 0.0
    %2092 = vmatpush1.msra.mxu0 %v189
    %2093 = vmatprep.subr.mxu0 0.0
    %2094 = vmatpush1.msra.mxu0 %v188
    %2095 = vmatprep.subr.mxu0 0.0
    %2096 = vmatpush1.msra.mxu0 %v187
    %2097 = vmatprep.subr.mxu0 0.0
    %2098 = vmatpush1.msra.mxu0 %v186
    %2099 = vmatprep.subr.mxu0 0.0
    %2100 = vmatpush1.msra.mxu0 %v185
    %2101 = vmatprep.subr.mxu0 0.0
    %2102 = vmatpush2.msra.mxu0 0.0
    %2103 = vmatprep.subr.mxu0 0.0
    %2104 = vmatpush2.msra.mxu0 0.0
    %2105 = vmatprep.subr.mxu0 0.0
    %2106 = vmatpush2.msra.mxu0 0.0
    %2107 = vmatprep.subr.mxu0 0.0
    %2108 = vmatpush2.msra.mxu0 0.0
    %2109 = vmatprep.subr.mxu0 0.0
    %2110 = vmatpush2.msra.mxu0 0.0
    %2111 = vmatprep.subr.mxu0 0.0
    %2112 = vmatpush2.msra.mxu0 0.0
    %2113 = vmatprep.subr.mxu0 0.0
    %2114 = vmatpush2.msra.mxu0 0.0
    %2115 = vmatprep.subr.mxu0 0.0
    %2116 = vmatpush2.msra.mxu0 0.0
    %2117 = vmatprep.subr.mxu0 0.0
    %2118 = vmatpush2.msra.mxu0 0.0
    %2119 = vmatprep.subr.mxu0 0.0
    %2120 = vmatpush2.msra.mxu0 0.0
    %2121 = vmatprep.subr.mxu0 0.0
    %2122 = vmatpush2.msra.mxu0 0.0
    %2123 = vmatprep.subr.mxu0 0.0
    %2124 = vmatpush2.msra.mxu0 0.0
    %2125 = vmatprep.subr.mxu0 0.0
    %2126 = vmatpush2.msra.mxu0 0.0
    %2127 = vmatprep.subr.mxu0 0.0
    %2128 = vmatpush2.msra.mxu0 0.0
    %2129 = vmatprep.subr.mxu0 0.0
    %2130 = vmatpush2.msra.mxu0 0.0
    %2131 = vmatprep.subr.mxu0 0.0
    %2132 = vmatpush2.msra.mxu0 0.0
    %2133 = vmatprep.mubr.f32.mxu0 0.0
    %2134 = vmatmul.mubr.f32.gmra.mxu0 %v534
    %v2135 = vpop.f32.mrf.mxu0
    %v2136 = vadd.f32 %v2068, %v2135
    %v2137 = vpop.f32.mrf.mxu0
    %2138 = vmatprep.mubr.f32.mxu0 0.0
    %2139 = vmatmul.mubr.f32.gmra.mxu0 %v704
    %v2140 = vpop.f32.mrf.mxu0
    %v2141 = vadd.f32 %v2068, %v2140
    %v2142 = vpop.f32.mrf.mxu0
    %2143 = vmatprep.mubr.f32.mxu0 0.0
    %2144 = vmatmul.mubr.f32.gmra.mxu0 %v874
    %v2145 = vpop.f32.mrf.mxu0
    %v2146 = vadd.f32 %v2068, %v2145
    %v2147 = vpop.f32.mrf.mxu0
    %2148 = vmatprep.mubr.f32.mxu0 0.0
    %2149 = vmatmul.mubr.f32.gmra.mxu0 %v1044
    %v2150 = vpop.f32.mrf.mxu0
    %v2151 = vadd.f32 %v2068, %v2150
    %v2152 = vpop.f32.mrf.mxu0
    %2153 = vmatprep.mubr.f32.mxu0 0.0
    %2154 = vmatmul.mubr.f32.gmra.mxu0 %v1214
    %v2155 = vpop.f32.mrf.mxu0
    %v2156 = vadd.f32 %v2068, %v2155
    %v2157 = vpop.f32.mrf.mxu0
    %2158 = vmatprep.mubr.f32.mxu0 0.0
    %2159 = vmatmul.mubr.f32.gmra.mxu0 %v1384
    %v2160 = vpop.f32.mrf.mxu0
    %v2161 = vadd.f32 %v2068, %v2160
    %v2162 = vpop.f32.mrf.mxu0
    %2163 = vmatprep.mubr.f32.mxu0 0.0
    %2164 = vmatmul.mubr.f32.gmra.mxu0 %v1554
    %v2165 = vpop.f32.mrf.mxu0
    %v2166 = vadd.f32 %v2068, %v2165
    %v2167 = vpop.f32.mrf.mxu0
    %2168 = vmatprep.mubr.f32.mxu0 0.0
    %2169 = vmatmul.mubr.f32.gmra.mxu0 %v1724
    %v2170 = vpop.f32.mrf.mxu0
    %v2171 = vadd.f32 %v2068, %v2170
    %v2172 = vpop.f32.mrf.mxu0
    %2173 = vmatprep.mubr.f32.mxu0 0.0
    %2174 = vmatmul.mubr.f32.gmra.mxu0 %v1894
    %v2175 = vpop.f32.mrf.mxu0
    %v2176 = vadd.f32 %v2068, %v2175
    %v2177 = vpop.f32.mrf.mxu0
    %2178 = vmatprep.mubr.f32.mxu0 0.0
    %2179 = vmatmul.mubr.f32.gmra.mxu0 %v2064
    %v2180 = vpop.f32.mrf.mxu0
    %v2181 = vadd.f32 %v2068, %v2180
    %v2182 = vpop.f32.mrf.mxu0
    %2183 = vdwg.mxu0
    %2184 = vmax.xlane.f32.xlu0 %v2136
    %v2185 = vpop.xlane.xlu0 %2184
    %2186 = vmax.xlane.f32.xlu0 %v2141
    %v2187 = vpop.xlane.xlu0 %2186
    %2188 = vmax.xlane.f32.xlu0 %v2146
    %v2189 = vpop.xlane.xlu0 %2188
    %2190 = vmax.xlane.f32.xlu0 %v2151
    %v2191 = vpop.xlane.xlu0 %2190
    %2192 = vmax.xlane.f32.xlu0 %v2156
    %v2193 = vpop.xlane.xlu0 %2192
    %2194 = vmax.xlane.f32.xlu0 %v2161
    %v2195 = vpop.xlane.xlu0 %2194
    %2196 = vmax.xlane.f32.xlu0 %v2166
    %v2197 = vpop.xlane.xlu0 %2196
    %2198 = vmax.xlane.f32.xlu0 %v2171
    %v2199 = vpop.xlane.xlu0 %2198
    %2200 = vmax.xlane.f32.xlu0 %v2176
    %v2201 = vpop.xlane.xlu0 %2200
    %2202 = vmax.xlane.f32.xlu0 %v2181
    %v2203 = vpop.xlane.xlu0 %2202
    %v2204 = vsub.f32 %v2136, %v2185
    %v2205 = vsub.f32 %v2141, %v2187
    %v2206 = vsub.f32 %v2146, %v2189
    %v2207 = vsub.f32 %v2151, %v2191
    %v2208 = vsub.f32 %v2156, %v2193
    %v2209 = vsub.f32 %v2161, %v2195
    %v2210 = vsub.f32 %v2166, %v2197
    %v2211 = vsub.f32 %v2171, %v2199
    %v2212 = vsub.f32 %v2176, %v2201
    %v2213 = vsub.f32 %v2181, %v2203
    %v2214 = vmul.f32 %v2204, 1.442695
    %v2215 = vpow.pop %v2214
    %v2216 = vmul.f32 %v2205, 1.442695
    %v2217 = vpow.pop %v2216
    %v2218 = vmul.f32 %v2206, 1.442695
    %v2219 = vpow.pop %v2218
    %v2220 = vmul.f32 %v2207, 1.442695
    %v2221 = vpow.pop %v2220
    %v2222 = vmul.f32 %v2208, 1.442695
    %v2223 = vpow.pop %v2222
    %v2224 = vmul.f32 %v2209, 1.442695
    %v2225 = vpow.pop %v2224
    %v2226 = vmul.f32 %v2210, 1.442695
    %v2227 = vpow.pop %v2226
    %v2228 = vmul.f32 %v2211, 1.442695
    %v2229 = vpow.pop %v2228
    %v2230 = vmul.f32 %v2212, 1.442695
    %v2231 = vpow.pop %v2230
    %v2232 = vmul.f32 %v2213, 1.442695
    %v2233 = vpow.pop %v2232
    %2234 = vadd.xlane.f32.xlu0 %v2215
    %v2235 = vpop.xlane.xlu0 %2234
    %2236 = vadd.xlane.f32.xlu0 %v2217
    %v2237 = vpop.xlane.xlu0 %2236
    %2238 = vadd.xlane.f32.xlu0 %v2219
    %v2239 = vpop.xlane.xlu0 %2238
    %2240 = vadd.xlane.f32.xlu0 %v2221
    %v2241 = vpop.xlane.xlu0 %2240
    %2242 = vadd.xlane.f32.xlu0 %v2223
    %v2243 = vpop.xlane.xlu0 %2242
    %2244 = vadd.xlane.f32.xlu0 %v2225
    %v2245 = vpop.xlane.xlu0 %2244
    %2246 = vadd.xlane.f32.xlu0 %v2227
    %v2247 = vpop.xlane.xlu0 %2246
    %2248 = vadd.xlane.f32.xlu0 %v2229
    %v2249 = vpop.xlane.xlu0 %2248
    %2250 = vadd.xlane.f32.xlu0 %v2231
    %v2251 = vpop.xlane.xlu0 %2250
    %2252 = vadd.xlane.f32.xlu0 %v2233
    %v2253 = vpop.xlane.xlu0 %2252
    %v2254 = vrcp.pop %v2235
    %v2255 = vrcp.pop %v2237
    %v2256 = vrcp.pop %v2239
    %v2257 = vrcp.pop %v2241
    %v2258 = vrcp.pop %v2243
    %v2259 = vrcp.pop %v2245
    %v2260 = vrcp.pop %v2247
    %v2261 = vrcp.pop %v2249
    %v2262 = vrcp.pop %v2251
    %v2263 = vrcp.pop %v2253
    %v2264 = vmul.f32 %v2215, %v2254
    %v2265 = vmul.f32 %v2217, %v2255
    %v2266 = vmul.f32 %v2219, %v2256
    %v2267 = vmul.f32 %v2221, %v2257
    %v2268 = vmul.f32 %v2223, %v2258
    %v2269 = vmul.f32 %v2225, %v2259
    %v2270 = vmul.f32 %v2227, %v2260
    %v2271 = vmul.f32 %v2229, %v2261
    %v2272 = vmul.f32 %v2231, %v2262
    %v2273 = vmul.f32 %v2233, %v2263
    %2274 = vst [vmem:[#allocation8] sm:$0xff] %v2264
    %2275 = vst [vmem:[#allocation8 + $0x8] sm:$0xff] %v2265
    %2276 = vst [vmem:[#allocation8 + $0x10] sm:$0xff] %v2266
    %2277 = vst [vmem:[#allocation8 + $0x18] sm:$0xff] %v2267
    %2278 = vst [vmem:[#allocation8 + $0x20] sm:$0xff] %v2268
    %2279 = vst [vmem:[#allocation8 + $0x28] sm:$0xff] %v2269
    %2280 = vst [vmem:[#allocation8 + $0x30] sm:$0xff] %v2270
    %2281 = vst [vmem:[#allocation8 + $0x38] sm:$0xff] %v2271
    %2282 = vst [vmem:[#allocation8 + $0x40] sm:$0xff] %v2272
    %2283 = vst [vmem:[#allocation8 + $0x48] sm:$0xff] %v2273
    // Predicated region
    $region26: #{tpu_custom_call.1} parent=1 // pred_check
      _
    $region27: #{tpu_custom_call.1} parent=1 // pred_check_branch
      %2285 = sbr.rel (0) target = $region29
    $region28: #{tpu_custom_call.1} parent=1 // pred_region
      %s2287 = ssub.s32 1280, 1280
      %2288 = vsyncadd [#allocation4], %s2287
      %s2289 = sshll.u32 [#allocation8], 4
      %s2290 = int_to_ptr.vmem [resolvable:$true] %s2289
      %2295 = dma.vmem_to_hbm [thread:$0]  %s2290, 1280, %s3, [#allocation4], 128, 128, 8
    $region29: #{tpu_custom_call.1} parent=1 // pred_fallthru
      _
    // Predicated region
    $region30: #{tpu_custom_call.1} parent=1 // pred_check
      _
    $region31: #{tpu_custom_call.1} parent=1 // pred_check_branch
      %2297 = sbr.rel (0) target = $region33
    $region32: #{tpu_custom_call.1} parent=1 // pred_region
      %2298 = dma.done [#allocation4], 1280
    $region33: #{tpu_custom_call.1} parent=1 // pred_fallthru
      _
    %2299 = vsyncpa [#allocation3], 1
    %2300 = vsyncpa [#allocation6], 1
    %2301 = vsyncpa [#allocation4], 1

</llo_original>
